<compile_context>
chip_gen: v7x
topology: tpu7x:2x2x1
jax: 0.10.0
libtpu: 0.0.40
codegen_flags: <defaults>
</compile_context>

<pallas_src>
import jax
import jax.numpy as jnp
import numpy as np
from jax.experimental import pallas as pl
from jax.experimental.pallas import tpu as pltpu  # noqa: F401  (TPU backend)


# ----------------------------------------------------------------------------
# Fused Pallas kernel: num_layers x LSTM (wavefront)  +  FC head
# ----------------------------------------------------------------------------
def _make_decoder_kernel(num_layers, B, T, H, O, in_size, off):
    """Builds the fused kernel.

    Ref order:
      inputs : x (B,T,D)  f32
               w_slab     bf16  — all packed weights/biases (see pack_params)
               h0, c0     f32   — (L, B, H)
      outputs: pred (B,T,O), h_n (L,B,H), c_n (L,B,H)   all f32
    """
    f32, bf16 = jnp.float32, jnp.bfloat16
    G = 4 * H

    def kernel(x_ref, w_ref, h0_ref, c0_ref, pred_ref, hT_ref, cT_ref):
        # ---- one-time weight unpack (static slices, off the critical path)
        wih0 = w_ref[off["wih0"]:off["wih0"] + in_size, :]            # (D,4H)
        whh0 = w_ref[off["whh0"]:off["whh0"] + H, :]                  # (H,4H)
        b0 = w_ref[off["b0"]:off["b0"] + 1, :].astype(f32)            # (1,4H)
        stacked = []
        for l in range(1, num_layers):
            w_l = w_ref[off[f"w{l}"]:off[f"w{l}"] + 2 * H, :]         # (2H,4H)
            b_l = w_ref[off[f"b{l}"]:off[f"b{l}"] + 1, :].astype(f32)
            stacked.append((w_l, b_l))
        wfc = w_ref[off["wfc"]:off["wfc"] + H, 0:O]                   # (H,O)
        bfc = w_ref[off["bfc"]:off["bfc"] + 1, 0:O].astype(f32)       # (1,O)

        # ---- hoisted layer-0 input projection, converted to time-major
        x2d = x_ref[...].reshape(B * T, in_size).astype(bf16)
        proj0 = jnp.dot(x2d, wih0, preferred_element_type=f32) + b0   # (B*T,4H)
        proj0 = jnp.transpose(proj0.reshape(B, T, G), (1, 0, 2))      # (T,B,4H)

        # ---- recurrent state (f32 SSA values, no scratch refs)
        h = [h0_ref[l] for l in range(num_layers)]                    # (B,H) f32
        c = [c0_ref[l] for l in range(num_layers)]
        top = [None] * T

        def cell(gates, c_prev):
            # two WIDE EUP calls on the full (B, 4H) vreg, then aligned picks
            sg = jax.nn.sigmoid(gates)
            th = jnp.tanh(gates)
            i_g = sg[:, 0 * H:1 * H]
            f_g = sg[:, 1 * H:2 * H]
            g_g = th[:, 2 * H:3 * H]
            o_g = sg[:, 3 * H:4 * H]
            c_new = f_g * c_prev + i_g * g_g
            h_new = o_g * jnp.tanh(c_new)
            return h_new, c_new

        # ---- wavefront: step s runs layer l at time t = s - l.
        # Layers are processed in DECREASING order so layer l reads layer
        # l-1's output from the PREVIOUS wavefront step (its time-t value).
        for s in range(T + num_layers - 1):
            for l in range(num_layers - 1, -1, -1):
                t = s - l
                if t < 0 or t >= T:
                    continue
                if l == 0:
                    gates = proj0[t] + jnp.dot(
                        h[0].astype(bf16), whh0, preferred_element_type=f32)
                else:
                    w_l, b_l = stacked[l - 1]
                    inp = jnp.concatenate([h[l - 1], h[l]], axis=1)   # (B,2H)
                    gates = jnp.dot(inp.astype(bf16), w_l,
                                    preferred_element_type=f32) + b_l
                h[l], c[l] = cell(gates, c[l])
                if l == num_layers - 1:
                    top[t] = h[l]

        # ---- final states, written once per layer
        for l in range(num_layers):
            hT_ref[l] = h[l]
            cT_ref[l] = c[l]

        # ---- FC head on VMEM-resident top-layer activations
        acts = jnp.stack(top, axis=0)                                 # (T,B,H)
        acts = jnp.transpose(acts, (1, 0, 2)).reshape(B * T, H)       # (B*T,H)
        out = jnp.dot(acts.astype(bf16), wfc,
                      preferred_element_type=f32) + bfc               # (B*T,O)
        pred_ref[...] = out.reshape(B, T, O)

    return kernel


# ----------------------------------------------------------------------------
# Host-side weight packing: one bf16 slab, every block padded to 16 rows
# ----------------------------------------------------------------------------
def pack_params(params, input_size, hidden_size, output_size, num_layers):
    H, O = hidden_size, output_size
    cols = 4 * H
    assert O <= cols
    blocks, offsets = [], {}
    cursor = 0

    def add(name, mat):
        nonlocal cursor
        mat = np.asarray(mat, np.float32)
        r = mat.shape[0]
        r_pad = ((r + 15) // 16) * 16                # bf16-tile friendly
        blk = np.zeros((r_pad, cols), np.float32)
        blk[:r, :mat.shape[1]] = mat
        blocks.append(blk)
        offsets[name] = cursor
        cursor += r_pad

    p0 = params["lstm"][0]
    add("wih0", p0["wih_t"])                         # (D, 4H)
    add("whh0", p0["whh_t"])                         # (H, 4H)
    add("b0", p0["bias"])                            # (1, 4H)
    for l in range(1, num_layers):
        p = params["lstm"][l]
        add(f"w{l}", np.concatenate([np.asarray(p["wih_t"]),
                                     np.asarray(p["whh_t"])], axis=0))  # (2H,4H)
        add(f"b{l}", p["bias"])
    add("wfc", params["fc"]["w_t"])                  # (H, O) padded to 4H cols
    add("bfc", params["fc"]["b"])                    # (1, O) padded

    slab = jnp.asarray(np.concatenate(blocks, axis=0), jnp.bfloat16)
    return slab, offsets


# ----------------------------------------------------------------------------
# Wrapper (mirrors Decoder.forward(x, hidden))
# ----------------------------------------------------------------------------
def make_decoder_forward(num_layers, B, T, H, O, in_size, offsets):
    kernel = _make_decoder_kernel(num_layers, B, T, H, O, in_size, offsets)

    @jax.jit
    def forward(x, h0, c0, w_slab):
        pred, h_n, c_n = pl.pallas_call(
            kernel,
            out_shape=(jax.ShapeDtypeStruct((B, T, O), jnp.float32),
                       jax.ShapeDtypeStruct((num_layers, B, H), jnp.float32),
                       jax.ShapeDtypeStruct((num_layers, B, H), jnp.float32)),
        )(x.astype(jnp.float32), w_slab,
          h0.astype(jnp.float32), c0.astype(jnp.float32))
        return pred, (h_n, c_n)

    return forward


# ----------------------------------------------------------------------------
# Pure-JAX f32 reference (PyTorch LSTM semantics) for the correctness check
# ----------------------------------------------------------------------------
def decoder_reference(x, h0, c0, params):
    B, T, _ = x.shape
    num_layers = h0.shape[0]
    layer_in = x.astype(jnp.float32)
    h_finals, c_finals = [], []
    for layer in range(num_layers):
        p = params["lstm"][layer]
        H = h0.shape[-1]
        h, c = h0[layer], c0[layer]
        outs = []
        for t in range(T):
            gates = (layer_in[:, t, :] @ p["wih_t"] + h @ p["whh_t"]
                     + p["bias"])
            i_g = jax.nn.sigmoid(gates[:, 0 * H:1 * H])
            f_g = jax.nn.sigmoid(gates[:, 1 * H:2 * H])
            g_g = jnp.tanh(gates[:, 2 * H:3 * H])
            o_g = jax.nn.sigmoid(gates[:, 3 * H:4 * H])
            c = f_g * c + i_g * g_g
            h = o_g * jnp.tanh(c)
            outs.append(h)
        layer_in = jnp.stack(outs, axis=1)
        h_finals.append(h)
        c_finals.append(c)
    pred = layer_in @ params["fc"]["w_t"] + params["fc"]["b"]
    return pred, (jnp.stack(h_finals), jnp.stack(c_finals))


# ----------------------------------------------------------------------------
# Deterministic parameter init (PyTorch-style U(-1/sqrt(H), 1/sqrt(H)))
# ----------------------------------------------------------------------------
def init_params(key, input_size, hidden_size, output_size, num_layers):
    bound = 1.0 / np.sqrt(hidden_size)
    params = {"lstm": []}
    for layer in range(num_layers):
        d_in = input_size if layer == 0 else hidden_size
        key, k1, k2, k3, k4 = jax.random.split(key, 5)
        w_ih = jax.random.uniform(k1, (4 * hidden_size, d_in), jnp.float32,
                                  -bound, bound)
        w_hh = jax.random.uniform(k2, (4 * hidden_size, hidden_size),
                                  jnp.float32, -bound, bound)
        b_ih = jax.random.uniform(k3, (4 * hidden_size,), jnp.float32,
                                  -bound, bound)
        b_hh = jax.random.uniform(k4, (4 * hidden_size,), jnp.float32,
                                  -bound, bound)
        params["lstm"].append({
            "wih_t": w_ih.T,                              # (d_in, 4H)
            "whh_t": w_hh.T,                              # (H, 4H)
            "bias": (b_ih + b_hh).reshape(1, 4 * hidden_size),
        })
    key, k5, k6 = jax.random.split(key, 3)
    fc_bound = 1.0 / np.sqrt(hidden_size)
    w_fc = jax.random.uniform(k5, (output_size, hidden_size), jnp.float32,
                              -fc_bound, fc_bound)
    b_fc = jax.random.uniform(k6, (output_size,), jnp.float32,
                              -fc_bound, fc_bound)
    params["fc"] = {"w_t": w_fc.T, "b": b_fc.reshape(1, output_size)}
    return params


# ----------------------------------------------------------------------------
# Main
# ----------------------------------------------------------------------------
if __name__ == "__main__":
    # config: input_size=16, hidden_size=32, output_size=8, num_layers=2
    B, T = 2, 8
    INPUT_SIZE, HIDDEN_SIZE, OUTPUT_SIZE, NUM_LAYERS = 16, 32, 8, 2

    root = jax.random.PRNGKey(0)
    k_param, k_x, k_h, k_c = jax.random.split(root, 4)

    params = init_params(k_param, INPUT_SIZE, HIDDEN_SIZE, OUTPUT_SIZE,
                         NUM_LAYERS)
    x = jax.random.normal(k_x, (B, T, INPUT_SIZE), jnp.float32)
    h0 = jax.random.normal(k_h, (NUM_LAYERS, B, HIDDEN_SIZE), jnp.float32)
    c0 = jax.random.normal(k_c, (NUM_LAYERS, B, HIDDEN_SIZE), jnp.float32)

    w_slab, offsets = pack_params(params, INPUT_SIZE, HIDDEN_SIZE,
                                  OUTPUT_SIZE, NUM_LAYERS)
    decoder_forward = make_decoder_forward(NUM_LAYERS, B, T, HIDDEN_SIZE,
                                           OUTPUT_SIZE, INPUT_SIZE, offsets)

    pred, (h_n, c_n) = decoder_forward(x, h0, c0, w_slab)
    jax.block_until_ready((pred, h_n, c_n))

    # correctness check against pure-f32 JAX reference; tolerances are
    # loosened because the kernel uses bf16 MXU operands (f32 accumulation,
    # f32 cell state / elementwise math).
    pred_r, (h_r, c_r) = decoder_reference(x, h0, c0, params)
    np.testing.assert_allclose(np.asarray(pred), np.asarray(pred_r),
                               rtol=5e-2, atol=5e-2)
    np.testing.assert_allclose(np.asarray(h_n), np.asarray(h_r),
                               rtol=5e-2, atol=5e-2)
    np.testing.assert_allclose(np.asarray(c_n), np.asarray(c_r),
                               rtol=5e-2, atol=5e-2)

    assert pred.shape == (B, T, OUTPUT_SIZE)
    assert h_n.shape == (NUM_LAYERS, B, HIDDEN_SIZE)
    assert c_n.shape == (NUM_LAYERS, B, HIDDEN_SIZE)

    print("KERNEL_OK")
</pallas_src>

<mosaic_0001>
module attributes {stable_mosaic.version = 11 : i64} {
  func.func @kernel(%arg0: memref<2x8x16xf32, #tpu.memory_space<vmem>>, %arg1: memref<192x128xbf16, #tpu.memory_space<vmem>>, %arg2: memref<2x2x32xf32, #tpu.memory_space<vmem>>, %arg3: memref<2x2x32xf32, #tpu.memory_space<vmem>>, %arg4: memref<2x8x8xf32, #tpu.memory_space<vmem>>, %arg5: memref<2x2x32xf32, #tpu.memory_space<vmem>>, %arg6: memref<2x2x32xf32, #tpu.memory_space<vmem>>) attributes {dimension_semantics = [], scalar_prefetch = 0 : i64, scratch_operands = 0 : i64, tpu.core_type = #tpu.core_type<tc>} {
    %c0 = arith.constant 0 : index
    %c0_0 = arith.constant 0 : index
    %0 = vector.load %arg1[%c0, %c0_0] : memref<192x128xbf16, #tpu.memory_space<vmem>>, vector<16x128xbf16>
    %c16 = arith.constant 16 : index
    %c0_1 = arith.constant 0 : index
    %1 = vector.load %arg1[%c16, %c0_1] : memref<192x128xbf16, #tpu.memory_space<vmem>>, vector<32x128xbf16>
    %c48 = arith.constant 48 : index
    %c0_2 = arith.constant 0 : index
    %2 = vector.load %arg1[%c48, %c0_2] : memref<192x128xbf16, #tpu.memory_space<vmem>>, vector<1x128xbf16>
    %3 = arith.extf %2 : vector<1x128xbf16> to vector<1x128xf32>
    %c64 = arith.constant 64 : index
    %c0_3 = arith.constant 0 : index
    %4 = vector.load %arg1[%c64, %c0_3] : memref<192x128xbf16, #tpu.memory_space<vmem>>, vector<64x128xbf16>
    %c128 = arith.constant 128 : index
    %c0_4 = arith.constant 0 : index
    %5 = vector.load %arg1[%c128, %c0_4] : memref<192x128xbf16, #tpu.memory_space<vmem>>, vector<1x128xbf16>
    %6 = arith.extf %5 : vector<1x128xbf16> to vector<1x128xf32>
    %c144 = arith.constant 144 : index
    %c0_5 = arith.constant 0 : index
    %7 = vector.load %arg1[%c144, %c0_5] : memref<192x128xbf16, #tpu.memory_space<vmem>>, vector<32x8xbf16>
    %c176 = arith.constant 176 : index
    %c0_6 = arith.constant 0 : index
    %8 = vector.load %arg1[%c176, %c0_6] : memref<192x128xbf16, #tpu.memory_space<vmem>>, vector<1x8xbf16>
    %9 = arith.extf %8 : vector<1x8xbf16> to vector<1x8xf32>
    %c0_7 = arith.constant 0 : index
    %c0_8 = arith.constant 0 : index
    %c0_9 = arith.constant 0 : index
    %10 = vector.load %arg0[%c0_7, %c0_8, %c0_9] : memref<2x8x16xf32, #tpu.memory_space<vmem>>, vector<2x8x16xf32>
    %11 = vector.shape_cast %10 : vector<2x8x16xf32> to vector<16x16xf32>
    %12 = arith.truncf %11 : vector<16x16xf32> to vector<16x16xbf16>
    %cst = arith.constant dense<0.000000e+00> : vector<16x128xf32>
    %13 = tpu.matmul %12, %0, %cst {dimension_numbers = #tpu.dot_dimension_numbers<[1], [0], [0], [1], [0, 0, 1, 1], [], []>} : vector<16x16xbf16>, vector<16x128xbf16>, vector<16x128xf32> -> vector<16x128xf32>
    %14 = vector.broadcast %3 : vector<1x128xf32> to vector<16x128xf32>
    %15 = arith.addf %13, %14 : vector<16x128xf32>
    %16 = vector.shape_cast %15 : vector<16x128xf32> to vector<2x8x128xf32>
    %17 = tpu.transpose %16, [1, 0, 2] : vector<2x8x128xf32> -> vector<8x2x128xf32>
    %c0_10 = arith.constant 0 : index
    %c0_11 = arith.constant 0 : index
    %c0_12 = arith.constant 0 : index
    %18 = vector.load %arg2[%c0_10, %c0_11, %c0_12] : memref<2x2x32xf32, #tpu.memory_space<vmem>>, vector<1x2x32xf32>
    %19 = vector.shape_cast %18 : vector<1x2x32xf32> to vector<2x32xf32>
    %c1 = arith.constant 1 : index
    %c0_13 = arith.constant 0 : index
    %c0_14 = arith.constant 0 : index
    %20 = vector.load %arg2[%c1, %c0_13, %c0_14] : memref<2x2x32xf32, #tpu.memory_space<vmem>>, vector<1x2x32xf32>
    %21 = vector.shape_cast %20 : vector<1x2x32xf32> to vector<2x32xf32>
    %c0_15 = arith.constant 0 : index
    %c0_16 = arith.constant 0 : index
    %c0_17 = arith.constant 0 : index
    %22 = vector.load %arg3[%c0_15, %c0_16, %c0_17] : memref<2x2x32xf32, #tpu.memory_space<vmem>>, vector<1x2x32xf32>
    %23 = vector.shape_cast %22 : vector<1x2x32xf32> to vector<2x32xf32>
    %c1_18 = arith.constant 1 : index
    %c0_19 = arith.constant 0 : index
    %c0_20 = arith.constant 0 : index
    %24 = vector.load %arg3[%c1_18, %c0_19, %c0_20] : memref<2x2x32xf32, #tpu.memory_space<vmem>>, vector<1x2x32xf32>
    %25 = vector.shape_cast %24 : vector<1x2x32xf32> to vector<2x32xf32>
    %26 = vector.extract_strided_slice %17 {offsets = [0, 0, 0], sizes = [1, 2, 128], strides = [1, 1, 1]} : vector<8x2x128xf32> to vector<1x2x128xf32>
    %27 = vector.shape_cast %26 : vector<1x2x128xf32> to vector<2x128xf32>
    %28 = arith.truncf %19 : vector<2x32xf32> to vector<2x32xbf16>
    %cst_21 = arith.constant dense<0.000000e+00> : vector<2x128xf32>
    %29 = tpu.matmul %28, %1, %cst_21 {dimension_numbers = #tpu.dot_dimension_numbers<[1], [0], [0], [1], [0, 0, 1, 1], [], []>} : vector<2x32xbf16>, vector<32x128xbf16>, vector<2x128xf32> -> vector<2x128xf32>
    %30 = arith.addf %27, %29 : vector<2x128xf32>
    %31 = arith.negf %30 : vector<2x128xf32>
    %32 = math.exp %31 : vector<2x128xf32>
    %cst_22 = arith.constant 1.000000e+00 : f32
    %33 = vector.broadcast %cst_22 : f32 to vector<2x128xf32>
    %34 = arith.addf %33, %32 : vector<2x128xf32>
    %35 = arith.divf %33, %34 : vector<2x128xf32>
    %36 = math.tanh %30 : vector<2x128xf32>
    %37 = vector.extract_strided_slice %35 {offsets = [0, 0], sizes = [2, 32], strides = [1, 1]} : vector<2x128xf32> to vector<2x32xf32>
    %38 = vector.extract_strided_slice %35 {offsets = [0, 32], sizes = [2, 32], strides = [1, 1]} : vector<2x128xf32> to vector<2x32xf32>
    %39 = vector.extract_strided_slice %36 {offsets = [0, 64], sizes = [2, 32], strides = [1, 1]} : vector<2x128xf32> to vector<2x32xf32>
    %40 = vector.extract_strided_slice %35 {offsets = [0, 96], sizes = [2, 32], strides = [1, 1]} : vector<2x128xf32> to vector<2x32xf32>
    %41 = arith.mulf %38, %23 : vector<2x32xf32>
    %42 = arith.mulf %37, %39 : vector<2x32xf32>
    %43 = arith.addf %41, %42 : vector<2x32xf32>
    %44 = math.tanh %43 : vector<2x32xf32>
    %45 = arith.mulf %40, %44 : vector<2x32xf32>
    %46 = tpu.concatenate %45, %21 in 1 : vector<2x32xf32>, vector<2x32xf32> -> vector<2x64xf32>
    %47 = arith.truncf %46 : vector<2x64xf32> to vector<2x64xbf16>
    %cst_23 = arith.constant dense<0.000000e+00> : vector<2x128xf32>
    %48 = tpu.matmul %47, %4, %cst_23 {dimension_numbers = #tpu.dot_dimension_numbers<[1], [0], [0], [1], [0, 0, 1, 1], [], []>} : vector<2x64xbf16>, vector<64x128xbf16>, vector<2x128xf32> -> vector<2x128xf32>
    %49 = vector.broadcast %6 : vector<1x128xf32> to vector<2x128xf32>
    %50 = arith.addf %48, %49 : vector<2x128xf32>
    %51 = arith.negf %50 : vector<2x128xf32>
    %52 = math.exp %51 : vector<2x128xf32>
    %cst_24 = arith.constant 1.000000e+00 : f32
    %53 = vector.broadcast %cst_24 : f32 to vector<2x128xf32>
    %54 = arith.addf %53, %52 : vector<2x128xf32>
    %55 = arith.divf %53, %54 : vector<2x128xf32>
    %56 = math.tanh %50 : vector<2x128xf32>
    %57 = vector.extract_strided_slice %55 {offsets = [0, 0], sizes = [2, 32], strides = [1, 1]} : vector<2x128xf32> to vector<2x32xf32>
    %58 = vector.extract_strided_slice %55 {offsets = [0, 32], sizes = [2, 32], strides = [1, 1]} : vector<2x128xf32> to vector<2x32xf32>
    %59 = vector.extract_strided_slice %56 {offsets = [0, 64], sizes = [2, 32], strides = [1, 1]} : vector<2x128xf32> to vector<2x32xf32>
    %60 = vector.extract_strided_slice %55 {offsets = [0, 96], sizes = [2, 32], strides = [1, 1]} : vector<2x128xf32> to vector<2x32xf32>
    %61 = arith.mulf %58, %25 : vector<2x32xf32>
    %62 = arith.mulf %57, %59 : vector<2x32xf32>
    %63 = arith.addf %61, %62 : vector<2x32xf32>
    %64 = math.tanh %63 : vector<2x32xf32>
    %65 = arith.mulf %60, %64 : vector<2x32xf32>
    %66 = vector.extract_strided_slice %17 {offsets = [1, 0, 0], sizes = [1, 2, 128], strides = [1, 1, 1]} : vector<8x2x128xf32> to vector<1x2x128xf32>
    %67 = vector.shape_cast %66 : vector<1x2x128xf32> to vector<2x128xf32>
    %68 = arith.truncf %45 : vector<2x32xf32> to vector<2x32xbf16>
    %cst_25 = arith.constant dense<0.000000e+00> : vector<2x128xf32>
    %69 = tpu.matmul %68, %1, %cst_25 {dimension_numbers = #tpu.dot_dimension_numbers<[1], [0], [0], [1], [0, 0, 1, 1], [], []>} : vector<2x32xbf16>, vector<32x128xbf16>, vector<2x128xf32> -> vector<2x128xf32>
    %70 = arith.addf %67, %69 : vector<2x128xf32>
    %71 = arith.negf %70 : vector<2x128xf32>
    %72 = math.exp %71 : vector<2x128xf32>
    %cst_26 = arith.constant 1.000000e+00 : f32
    %73 = vector.broadcast %cst_26 : f32 to vector<2x128xf32>
    %74 = arith.addf %73, %72 : vector<2x128xf32>
    %75 = arith.divf %73, %74 : vector<2x128xf32>
    %76 = math.tanh %70 : vector<2x128xf32>
    %77 = vector.extract_strided_slice %75 {offsets = [0, 0], sizes = [2, 32], strides = [1, 1]} : vector<2x128xf32> to vector<2x32xf32>
    %78 = vector.extract_strided_slice %75 {offsets = [0, 32], sizes = [2, 32], strides = [1, 1]} : vector<2x128xf32> to vector<2x32xf32>
    %79 = vector.extract_strided_slice %76 {offsets = [0, 64], sizes = [2, 32], strides = [1, 1]} : vector<2x128xf32> to vector<2x32xf32>
    %80 = vector.extract_strided_slice %75 {offsets = [0, 96], sizes = [2, 32], strides = [1, 1]} : vector<2x128xf32> to vector<2x32xf32>
    %81 = arith.mulf %78, %43 : vector<2x32xf32>
    %82 = arith.mulf %77, %79 : vector<2x32xf32>
    %83 = arith.addf %81, %82 : vector<2x32xf32>
    %84 = math.tanh %83 : vector<2x32xf32>
    %85 = arith.mulf %80, %84 : vector<2x32xf32>
    %86 = tpu.concatenate %85, %65 in 1 : vector<2x32xf32>, vector<2x32xf32> -> vector<2x64xf32>
    %87 = arith.truncf %86 : vector<2x64xf32> to vector<2x64xbf16>
    %cst_27 = arith.constant dense<0.000000e+00> : vector<2x128xf32>
    %88 = tpu.matmul %87, %4, %cst_27 {dimension_numbers = #tpu.dot_dimension_numbers<[1], [0], [0], [1], [0, 0, 1, 1], [], []>} : vector<2x64xbf16>, vector<64x128xbf16>, vector<2x128xf32> -> vector<2x128xf32>
    %89 = vector.broadcast %6 : vector<1x128xf32> to vector<2x128xf32>
    %90 = arith.addf %88, %89 : vector<2x128xf32>
    %91 = arith.negf %90 : vector<2x128xf32>
    %92 = math.exp %91 : vector<2x128xf32>
    %cst_28 = arith.constant 1.000000e+00 : f32
    %93 = vector.broadcast %cst_28 : f32 to vector<2x128xf32>
    %94 = arith.addf %93, %92 : vector<2x128xf32>
    %95 = arith.divf %93, %94 : vector<2x128xf32>
    %96 = math.tanh %90 : vector<2x128xf32>
    %97 = vector.extract_strided_slice %95 {offsets = [0, 0], sizes = [2, 32], strides = [1, 1]} : vector<2x128xf32> to vector<2x32xf32>
    %98 = vector.extract_strided_slice %95 {offsets = [0, 32], sizes = [2, 32], strides = [1, 1]} : vector<2x128xf32> to vector<2x32xf32>
    %99 = vector.extract_strided_slice %96 {offsets = [0, 64], sizes = [2, 32], strides = [1, 1]} : vector<2x128xf32> to vector<2x32xf32>
    %100 = vector.extract_strided_slice %95 {offsets = [0, 96], sizes = [2, 32], strides = [1, 1]} : vector<2x128xf32> to vector<2x32xf32>
    %101 = arith.mulf %98, %63 : vector<2x32xf32>
    %102 = arith.mulf %97, %99 : vector<2x32xf32>
    %103 = arith.addf %101, %102 : vector<2x32xf32>
    %104 = math.tanh %103 : vector<2x32xf32>
    %105 = arith.mulf %100, %104 : vector<2x32xf32>
    %106 = vector.extract_strided_slice %17 {offsets = [2, 0, 0], sizes = [1, 2, 128], strides = [1, 1, 1]} : vector<8x2x128xf32> to vector<1x2x128xf32>
    %107 = vector.shape_cast %106 : vector<1x2x128xf32> to vector<2x128xf32>
    %108 = arith.truncf %85 : vector<2x32xf32> to vector<2x32xbf16>
    %cst_29 = arith.constant dense<0.000000e+00> : vector<2x128xf32>
    %109 = tpu.matmul %108, %1, %cst_29 {dimension_numbers = #tpu.dot_dimension_numbers<[1], [0], [0], [1], [0, 0, 1, 1], [], []>} : vector<2x32xbf16>, vector<32x128xbf16>, vector<2x128xf32> -> vector<2x128xf32>
    %110 = arith.addf %107, %109 : vector<2x128xf32>
    %111 = arith.negf %110 : vector<2x128xf32>
    %112 = math.exp %111 : vector<2x128xf32>
    %cst_30 = arith.constant 1.000000e+00 : f32
    %113 = vector.broadcast %cst_30 : f32 to vector<2x128xf32>
    %114 = arith.addf %113, %112 : vector<2x128xf32>
    %115 = arith.divf %113, %114 : vector<2x128xf32>
    %116 = math.tanh %110 : vector<2x128xf32>
    %117 = vector.extract_strided_slice %115 {offsets = [0, 0], sizes = [2, 32], strides = [1, 1]} : vector<2x128xf32> to vector<2x32xf32>
    %118 = vector.extract_strided_slice %115 {offsets = [0, 32], sizes = [2, 32], strides = [1, 1]} : vector<2x128xf32> to vector<2x32xf32>
    %119 = vector.extract_strided_slice %116 {offsets = [0, 64], sizes = [2, 32], strides = [1, 1]} : vector<2x128xf32> to vector<2x32xf32>
    %120 = vector.extract_strided_slice %115 {offsets = [0, 96], sizes = [2, 32], strides = [1, 1]} : vector<2x128xf32> to vector<2x32xf32>
    %121 = arith.mulf %118, %83 : vector<2x32xf32>
    %122 = arith.mulf %117, %119 : vector<2x32xf32>
    %123 = arith.addf %121, %122 : vector<2x32xf32>
    %124 = math.tanh %123 : vector<2x32xf32>
    %125 = arith.mulf %120, %124 : vector<2x32xf32>
    %126 = tpu.concatenate %125, %105 in 1 : vector<2x32xf32>, vector<2x32xf32> -> vector<2x64xf32>
    %127 = arith.truncf %126 : vector<2x64xf32> to vector<2x64xbf16>
    %cst_31 = arith.constant dense<0.000000e+00> : vector<2x128xf32>
    %128 = tpu.matmul %127, %4, %cst_31 {dimension_numbers = #tpu.dot_dimension_numbers<[1], [0], [0], [1], [0, 0, 1, 1], [], []>} : vector<2x64xbf16>, vector<64x128xbf16>, vector<2x128xf32> -> vector<2x128xf32>
    %129 = vector.broadcast %6 : vector<1x128xf32> to vector<2x128xf32>
    %130 = arith.addf %128, %129 : vector<2x128xf32>
    %131 = arith.negf %130 : vector<2x128xf32>
    %132 = math.exp %131 : vector<2x128xf32>
    %cst_32 = arith.constant 1.000000e+00 : f32
    %133 = vector.broadcast %cst_32 : f32 to vector<2x128xf32>
    %134 = arith.addf %133, %132 : vector<2x128xf32>
    %135 = arith.divf %133, %134 : vector<2x128xf32>
    %136 = math.tanh %130 : vector<2x128xf32>
    %137 = vector.extract_strided_slice %135 {offsets = [0, 0], sizes = [2, 32], strides = [1, 1]} : vector<2x128xf32> to vector<2x32xf32>
    %138 = vector.extract_strided_slice %135 {offsets = [0, 32], sizes = [2, 32], strides = [1, 1]} : vector<2x128xf32> to vector<2x32xf32>
    %139 = vector.extract_strided_slice %136 {offsets = [0, 64], sizes = [2, 32], strides = [1, 1]} : vector<2x128xf32> to vector<2x32xf32>
    %140 = vector.extract_strided_slice %135 {offsets = [0, 96], sizes = [2, 32], strides = [1, 1]} : vector<2x128xf32> to vector<2x32xf32>
    %141 = arith.mulf %138, %103 : vector<2x32xf32>
    %142 = arith.mulf %137, %139 : vector<2x32xf32>
    %143 = arith.addf %141, %142 : vector<2x32xf32>
    %144 = math.tanh %143 : vector<2x32xf32>
    %145 = arith.mulf %140, %144 : vector<2x32xf32>
    %146 = vector.extract_strided_slice %17 {offsets = [3, 0, 0], sizes = [1, 2, 128], strides = [1, 1, 1]} : vector<8x2x128xf32> to vector<1x2x128xf32>
    %147 = vector.shape_cast %146 : vector<1x2x128xf32> to vector<2x128xf32>
    %148 = arith.truncf %125 : vector<2x32xf32> to vector<2x32xbf16>
    %cst_33 = arith.constant dense<0.000000e+00> : vector<2x128xf32>
    %149 = tpu.matmul %148, %1, %cst_33 {dimension_numbers = #tpu.dot_dimension_numbers<[1], [0], [0], [1], [0, 0, 1, 1], [], []>} : vector<2x32xbf16>, vector<32x128xbf16>, vector<2x128xf32> -> vector<2x128xf32>
    %150 = arith.addf %147, %149 : vector<2x128xf32>
    %151 = arith.negf %150 : vector<2x128xf32>
    %152 = math.exp %151 : vector<2x128xf32>
    %cst_34 = arith.constant 1.000000e+00 : f32
    %153 = vector.broadcast %cst_34 : f32 to vector<2x128xf32>
    %154 = arith.addf %153, %152 : vector<2x128xf32>
    %155 = arith.divf %153, %154 : vector<2x128xf32>
    %156 = math.tanh %150 : vector<2x128xf32>
    %157 = vector.extract_strided_slice %155 {offsets = [0, 0], sizes = [2, 32], strides = [1, 1]} : vector<2x128xf32> to vector<2x32xf32>
    %158 = vector.extract_strided_slice %155 {offsets = [0, 32], sizes = [2, 32], strides = [1, 1]} : vector<2x128xf32> to vector<2x32xf32>
    %159 = vector.extract_strided_slice %156 {offsets = [0, 64], sizes = [2, 32], strides = [1, 1]} : vector<2x128xf32> to vector<2x32xf32>
    %160 = vector.extract_strided_slice %155 {offsets = [0, 96], sizes = [2, 32], strides = [1, 1]} : vector<2x128xf32> to vector<2x32xf32>
    %161 = arith.mulf %158, %123 : vector<2x32xf32>
    %162 = arith.mulf %157, %159 : vector<2x32xf32>
    %163 = arith.addf %161, %162 : vector<2x32xf32>
    %164 = math.tanh %163 : vector<2x32xf32>
    %165 = arith.mulf %160, %164 : vector<2x32xf32>
    %166 = tpu.concatenate %165, %145 in 1 : vector<2x32xf32>, vector<2x32xf32> -> vector<2x64xf32>
    %167 = arith.truncf %166 : vector<2x64xf32> to vector<2x64xbf16>
    %cst_35 = arith.constant dense<0.000000e+00> : vector<2x128xf32>
    %168 = tpu.matmul %167, %4, %cst_35 {dimension_numbers = #tpu.dot_dimension_numbers<[1], [0], [0], [1], [0, 0, 1, 1], [], []>} : vector<2x64xbf16>, vector<64x128xbf16>, vector<2x128xf32> -> vector<2x128xf32>
    %169 = vector.broadcast %6 : vector<1x128xf32> to vector<2x128xf32>
    %170 = arith.addf %168, %169 : vector<2x128xf32>
    %171 = arith.negf %170 : vector<2x128xf32>
    %172 = math.exp %171 : vector<2x128xf32>
    %cst_36 = arith.constant 1.000000e+00 : f32
    %173 = vector.broadcast %cst_36 : f32 to vector<2x128xf32>
    %174 = arith.addf %173, %172 : vector<2x128xf32>
    %175 = arith.divf %173, %174 : vector<2x128xf32>
    %176 = math.tanh %170 : vector<2x128xf32>
    %177 = vector.extract_strided_slice %175 {offsets = [0, 0], sizes = [2, 32], strides = [1, 1]} : vector<2x128xf32> to vector<2x32xf32>
    %178 = vector.extract_strided_slice %175 {offsets = [0, 32], sizes = [2, 32], strides = [1, 1]} : vector<2x128xf32> to vector<2x32xf32>
    %179 = vector.extract_strided_slice %176 {offsets = [0, 64], sizes = [2, 32], strides = [1, 1]} : vector<2x128xf32> to vector<2x32xf32>
    %180 = vector.extract_strided_slice %175 {offsets = [0, 96], sizes = [2, 32], strides = [1, 1]} : vector<2x128xf32> to vector<2x32xf32>
    %181 = arith.mulf %178, %143 : vector<2x32xf32>
    %182 = arith.mulf %177, %179 : vector<2x32xf32>
    %183 = arith.addf %181, %182 : vector<2x32xf32>
    %184 = math.tanh %183 : vector<2x32xf32>
    %185 = arith.mulf %180, %184 : vector<2x32xf32>
    %186 = vector.extract_strided_slice %17 {offsets = [4, 0, 0], sizes = [1, 2, 128], strides = [1, 1, 1]} : vector<8x2x128xf32> to vector<1x2x128xf32>
    %187 = vector.shape_cast %186 : vector<1x2x128xf32> to vector<2x128xf32>
    %188 = arith.truncf %165 : vector<2x32xf32> to vector<2x32xbf16>
    %cst_37 = arith.constant dense<0.000000e+00> : vector<2x128xf32>
    %189 = tpu.matmul %188, %1, %cst_37 {dimension_numbers = #tpu.dot_dimension_numbers<[1], [0], [0], [1], [0, 0, 1, 1], [], []>} : vector<2x32xbf16>, vector<32x128xbf16>, vector<2x128xf32> -> vector<2x128xf32>
    %190 = arith.addf %187, %189 : vector<2x128xf32>
    %191 = arith.negf %190 : vector<2x128xf32>
    %192 = math.exp %191 : vector<2x128xf32>
    %cst_38 = arith.constant 1.000000e+00 : f32
    %193 = vector.broadcast %cst_38 : f32 to vector<2x128xf32>
    %194 = arith.addf %193, %192 : vector<2x128xf32>
    %195 = arith.divf %193, %194 : vector<2x128xf32>
    %196 = math.tanh %190 : vector<2x128xf32>
    %197 = vector.extract_strided_slice %195 {offsets = [0, 0], sizes = [2, 32], strides = [1, 1]} : vector<2x128xf32> to vector<2x32xf32>
    %198 = vector.extract_strided_slice %195 {offsets = [0, 32], sizes = [2, 32], strides = [1, 1]} : vector<2x128xf32> to vector<2x32xf32>
    %199 = vector.extract_strided_slice %196 {offsets = [0, 64], sizes = [2, 32], strides = [1, 1]} : vector<2x128xf32> to vector<2x32xf32>
    %200 = vector.extract_strided_slice %195 {offsets = [0, 96], sizes = [2, 32], strides = [1, 1]} : vector<2x128xf32> to vector<2x32xf32>
    %201 = arith.mulf %198, %163 : vector<2x32xf32>
    %202 = arith.mulf %197, %199 : vector<2x32xf32>
    %203 = arith.addf %201, %202 : vector<2x32xf32>
    %204 = math.tanh %203 : vector<2x32xf32>
    %205 = arith.mulf %200, %204 : vector<2x32xf32>
    %206 = tpu.concatenate %205, %185 in 1 : vector<2x32xf32>, vector<2x32xf32> -> vector<2x64xf32>
    %207 = arith.truncf %206 : vector<2x64xf32> to vector<2x64xbf16>
    %cst_39 = arith.constant dense<0.000000e+00> : vector<2x128xf32>
    %208 = tpu.matmul %207, %4, %cst_39 {dimension_numbers = #tpu.dot_dimension_numbers<[1], [0], [0], [1], [0, 0, 1, 1], [], []>} : vector<2x64xbf16>, vector<64x128xbf16>, vector<2x128xf32> -> vector<2x128xf32>
    %209 = vector.broadcast %6 : vector<1x128xf32> to vector<2x128xf32>
    %210 = arith.addf %208, %209 : vector<2x128xf32>
    %211 = arith.negf %210 : vector<2x128xf32>
    %212 = math.exp %211 : vector<2x128xf32>
    %cst_40 = arith.constant 1.000000e+00 : f32
    %213 = vector.broadcast %cst_40 : f32 to vector<2x128xf32>
    %214 = arith.addf %213, %212 : vector<2x128xf32>
    %215 = arith.divf %213, %214 : vector<2x128xf32>
    %216 = math.tanh %210 : vector<2x128xf32>
    %217 = vector.extract_strided_slice %215 {offsets = [0, 0], sizes = [2, 32], strides = [1, 1]} : vector<2x128xf32> to vector<2x32xf32>
    %218 = vector.extract_strided_slice %215 {offsets = [0, 32], sizes = [2, 32], strides = [1, 1]} : vector<2x128xf32> to vector<2x32xf32>
    %219 = vector.extract_strided_slice %216 {offsets = [0, 64], sizes = [2, 32], strides = [1, 1]} : vector<2x128xf32> to vector<2x32xf32>
    %220 = vector.extract_strided_slice %215 {offsets = [0, 96], sizes = [2, 32], strides = [1, 1]} : vector<2x128xf32> to vector<2x32xf32>
    %221 = arith.mulf %218, %183 : vector<2x32xf32>
    %222 = arith.mulf %217, %219 : vector<2x32xf32>
    %223 = arith.addf %221, %222 : vector<2x32xf32>
    %224 = math.tanh %223 : vector<2x32xf32>
    %225 = arith.mulf %220, %224 : vector<2x32xf32>
    %226 = vector.extract_strided_slice %17 {offsets = [5, 0, 0], sizes = [1, 2, 128], strides = [1, 1, 1]} : vector<8x2x128xf32> to vector<1x2x128xf32>
    %227 = vector.shape_cast %226 : vector<1x2x128xf32> to vector<2x128xf32>
    %228 = arith.truncf %205 : vector<2x32xf32> to vector<2x32xbf16>
    %cst_41 = arith.constant dense<0.000000e+00> : vector<2x128xf32>
    %229 = tpu.matmul %228, %1, %cst_41 {dimension_numbers = #tpu.dot_dimension_numbers<[1], [0], [0], [1], [0, 0, 1, 1], [], []>} : vector<2x32xbf16>, vector<32x128xbf16>, vector<2x128xf32> -> vector<2x128xf32>
    %230 = arith.addf %227, %229 : vector<2x128xf32>
    %231 = arith.negf %230 : vector<2x128xf32>
    %232 = math.exp %231 : vector<2x128xf32>
    %cst_42 = arith.constant 1.000000e+00 : f32
    %233 = vector.broadcast %cst_42 : f32 to vector<2x128xf32>
    %234 = arith.addf %233, %232 : vector<2x128xf32>
    %235 = arith.divf %233, %234 : vector<2x128xf32>
    %236 = math.tanh %230 : vector<2x128xf32>
    %237 = vector.extract_strided_slice %235 {offsets = [0, 0], sizes = [2, 32], strides = [1, 1]} : vector<2x128xf32> to vector<2x32xf32>
    %238 = vector.extract_strided_slice %235 {offsets = [0, 32], sizes = [2, 32], strides = [1, 1]} : vector<2x128xf32> to vector<2x32xf32>
    %239 = vector.extract_strided_slice %236 {offsets = [0, 64], sizes = [2, 32], strides = [1, 1]} : vector<2x128xf32> to vector<2x32xf32>
    %240 = vector.extract_strided_slice %235 {offsets = [0, 96], sizes = [2, 32], strides = [1, 1]} : vector<2x128xf32> to vector<2x32xf32>
    %241 = arith.mulf %238, %203 : vector<2x32xf32>
    %242 = arith.mulf %237, %239 : vector<2x32xf32>
    %243 = arith.addf %241, %242 : vector<2x32xf32>
    %244 = math.tanh %243 : vector<2x32xf32>
    %245 = arith.mulf %240, %244 : vector<2x32xf32>
    %246 = tpu.concatenate %245, %225 in 1 : vector<2x32xf32>, vector<2x32xf32> -> vector<2x64xf32>
    %247 = arith.truncf %246 : vector<2x64xf32> to vector<2x64xbf16>
    %cst_43 = arith.constant dense<0.000000e+00> : vector<2x128xf32>
    %248 = tpu.matmul %247, %4, %cst_43 {dimension_numbers = #tpu.dot_dimension_numbers<[1], [0], [0], [1], [0, 0, 1, 1], [], []>} : vector<2x64xbf16>, vector<64x128xbf16>, vector<2x128xf32> -> vector<2x128xf32>
    %249 = vector.broadcast %6 : vector<1x128xf32> to vector<2x128xf32>
    %250 = arith.addf %248, %249 : vector<2x128xf32>
    %251 = arith.negf %250 : vector<2x128xf32>
    %252 = math.exp %251 : vector<2x128xf32>
    %cst_44 = arith.constant 1.000000e+00 : f32
    %253 = vector.broadcast %cst_44 : f32 to vector<2x128xf32>
    %254 = arith.addf %253, %252 : vector<2x128xf32>
    %255 = arith.divf %253, %254 : vector<2x128xf32>
    %256 = math.tanh %250 : vector<2x128xf32>
    %257 = vector.extract_strided_slice %255 {offsets = [0, 0], sizes = [2, 32], strides = [1, 1]} : vector<2x128xf32> to vector<2x32xf32>
    %258 = vector.extract_strided_slice %255 {offsets = [0, 32], sizes = [2, 32], strides = [1, 1]} : vector<2x128xf32> to vector<2x32xf32>
    %259 = vector.extract_strided_slice %256 {offsets = [0, 64], sizes = [2, 32], strides = [1, 1]} : vector<2x128xf32> to vector<2x32xf32>
    %260 = vector.extract_strided_slice %255 {offsets = [0, 96], sizes = [2, 32], strides = [1, 1]} : vector<2x128xf32> to vector<2x32xf32>
    %261 = arith.mulf %258, %223 : vector<2x32xf32>
    %262 = arith.mulf %257, %259 : vector<2x32xf32>
    %263 = arith.addf %261, %262 : vector<2x32xf32>
    %264 = math.tanh %263 : vector<2x32xf32>
    %265 = arith.mulf %260, %264 : vector<2x32xf32>
    %266 = vector.extract_strided_slice %17 {offsets = [6, 0, 0], sizes = [1, 2, 128], strides = [1, 1, 1]} : vector<8x2x128xf32> to vector<1x2x128xf32>
    %267 = vector.shape_cast %266 : vector<1x2x128xf32> to vector<2x128xf32>
    %268 = arith.truncf %245 : vector<2x32xf32> to vector<2x32xbf16>
    %cst_45 = arith.constant dense<0.000000e+00> : vector<2x128xf32>
    %269 = tpu.matmul %268, %1, %cst_45 {dimension_numbers = #tpu.dot_dimension_numbers<[1], [0], [0], [1], [0, 0, 1, 1], [], []>} : vector<2x32xbf16>, vector<32x128xbf16>, vector<2x128xf32> -> vector<2x128xf32>
    %270 = arith.addf %267, %269 : vector<2x128xf32>
    %271 = arith.negf %270 : vector<2x128xf32>
    %272 = math.exp %271 : vector<2x128xf32>
    %cst_46 = arith.constant 1.000000e+00 : f32
    %273 = vector.broadcast %cst_46 : f32 to vector<2x128xf32>
    %274 = arith.addf %273, %272 : vector<2x128xf32>
    %275 = arith.divf %273, %274 : vector<2x128xf32>
    %276 = math.tanh %270 : vector<2x128xf32>
    %277 = vector.extract_strided_slice %275 {offsets = [0, 0], sizes = [2, 32], strides = [1, 1]} : vector<2x128xf32> to vector<2x32xf32>
    %278 = vector.extract_strided_slice %275 {offsets = [0, 32], sizes = [2, 32], strides = [1, 1]} : vector<2x128xf32> to vector<2x32xf32>
    %279 = vector.extract_strided_slice %276 {offsets = [0, 64], sizes = [2, 32], strides = [1, 1]} : vector<2x128xf32> to vector<2x32xf32>
    %280 = vector.extract_strided_slice %275 {offsets = [0, 96], sizes = [2, 32], strides = [1, 1]} : vector<2x128xf32> to vector<2x32xf32>
    %281 = arith.mulf %278, %243 : vector<2x32xf32>
    %282 = arith.mulf %277, %279 : vector<2x32xf32>
    %283 = arith.addf %281, %282 : vector<2x32xf32>
    %284 = math.tanh %283 : vector<2x32xf32>
    %285 = arith.mulf %280, %284 : vector<2x32xf32>
    %286 = tpu.concatenate %285, %265 in 1 : vector<2x32xf32>, vector<2x32xf32> -> vector<2x64xf32>
    %287 = arith.truncf %286 : vector<2x64xf32> to vector<2x64xbf16>
    %cst_47 = arith.constant dense<0.000000e+00> : vector<2x128xf32>
    %288 = tpu.matmul %287, %4, %cst_47 {dimension_numbers = #tpu.dot_dimension_numbers<[1], [0], [0], [1], [0, 0, 1, 1], [], []>} : vector<2x64xbf16>, vector<64x128xbf16>, vector<2x128xf32> -> vector<2x128xf32>
    %289 = vector.broadcast %6 : vector<1x128xf32> to vector<2x128xf32>
    %290 = arith.addf %288, %289 : vector<2x128xf32>
    %291 = arith.negf %290 : vector<2x128xf32>
    %292 = math.exp %291 : vector<2x128xf32>
    %cst_48 = arith.constant 1.000000e+00 : f32
    %293 = vector.broadcast %cst_48 : f32 to vector<2x128xf32>
    %294 = arith.addf %293, %292 : vector<2x128xf32>
    %295 = arith.divf %293, %294 : vector<2x128xf32>
    %296 = math.tanh %290 : vector<2x128xf32>
    %297 = vector.extract_strided_slice %295 {offsets = [0, 0], sizes = [2, 32], strides = [1, 1]} : vector<2x128xf32> to vector<2x32xf32>
    %298 = vector.extract_strided_slice %295 {offsets = [0, 32], sizes = [2, 32], strides = [1, 1]} : vector<2x128xf32> to vector<2x32xf32>
    %299 = vector.extract_strided_slice %296 {offsets = [0, 64], sizes = [2, 32], strides = [1, 1]} : vector<2x128xf32> to vector<2x32xf32>
    %300 = vector.extract_strided_slice %295 {offsets = [0, 96], sizes = [2, 32], strides = [1, 1]} : vector<2x128xf32> to vector<2x32xf32>
    %301 = arith.mulf %298, %263 : vector<2x32xf32>
    %302 = arith.mulf %297, %299 : vector<2x32xf32>
    %303 = arith.addf %301, %302 : vector<2x32xf32>
    %304 = math.tanh %303 : vector<2x32xf32>
    %305 = arith.mulf %300, %304 : vector<2x32xf32>
    %306 = vector.extract_strided_slice %17 {offsets = [7, 0, 0], sizes = [1, 2, 128], strides = [1, 1, 1]} : vector<8x2x128xf32> to vector<1x2x128xf32>
    %307 = vector.shape_cast %306 : vector<1x2x128xf32> to vector<2x128xf32>
    %308 = arith.truncf %285 : vector<2x32xf32> to vector<2x32xbf16>
    %cst_49 = arith.constant dense<0.000000e+00> : vector<2x128xf32>
    %309 = tpu.matmul %308, %1, %cst_49 {dimension_numbers = #tpu.dot_dimension_numbers<[1], [0], [0], [1], [0, 0, 1, 1], [], []>} : vector<2x32xbf16>, vector<32x128xbf16>, vector<2x128xf32> -> vector<2x128xf32>
    %310 = arith.addf %307, %309 : vector<2x128xf32>
    %311 = arith.negf %310 : vector<2x128xf32>
    %312 = math.exp %311 : vector<2x128xf32>
    %cst_50 = arith.constant 1.000000e+00 : f32
    %313 = vector.broadcast %cst_50 : f32 to vector<2x128xf32>
    %314 = arith.addf %313, %312 : vector<2x128xf32>
    %315 = arith.divf %313, %314 : vector<2x128xf32>
    %316 = math.tanh %310 : vector<2x128xf32>
    %317 = vector.extract_strided_slice %315 {offsets = [0, 0], sizes = [2, 32], strides = [1, 1]} : vector<2x128xf32> to vector<2x32xf32>
    %318 = vector.extract_strided_slice %315 {offsets = [0, 32], sizes = [2, 32], strides = [1, 1]} : vector<2x128xf32> to vector<2x32xf32>
    %319 = vector.extract_strided_slice %316 {offsets = [0, 64], sizes = [2, 32], strides = [1, 1]} : vector<2x128xf32> to vector<2x32xf32>
    %320 = vector.extract_strided_slice %315 {offsets = [0, 96], sizes = [2, 32], strides = [1, 1]} : vector<2x128xf32> to vector<2x32xf32>
    %321 = arith.mulf %318, %283 : vector<2x32xf32>
    %322 = arith.mulf %317, %319 : vector<2x32xf32>
    %323 = arith.addf %321, %322 : vector<2x32xf32>
    %324 = math.tanh %323 : vector<2x32xf32>
    %325 = arith.mulf %320, %324 : vector<2x32xf32>
    %326 = tpu.concatenate %325, %305 in 1 : vector<2x32xf32>, vector<2x32xf32> -> vector<2x64xf32>
    %327 = arith.truncf %326 : vector<2x64xf32> to vector<2x64xbf16>
    %cst_51 = arith.constant dense<0.000000e+00> : vector<2x128xf32>
    %328 = tpu.matmul %327, %4, %cst_51 {dimension_numbers = #tpu.dot_dimension_numbers<[1], [0], [0], [1], [0, 0, 1, 1], [], []>} : vector<2x64xbf16>, vector<64x128xbf16>, vector<2x128xf32> -> vector<2x128xf32>
    %329 = vector.broadcast %6 : vector<1x128xf32> to vector<2x128xf32>
    %330 = arith.addf %328, %329 : vector<2x128xf32>
    %331 = arith.negf %330 : vector<2x128xf32>
    %332 = math.exp %331 : vector<2x128xf32>
    %cst_52 = arith.constant 1.000000e+00 : f32
    %333 = vector.broadcast %cst_52 : f32 to vector<2x128xf32>
    %334 = arith.addf %333, %332 : vector<2x128xf32>
    %335 = arith.divf %333, %334 : vector<2x128xf32>
    %336 = math.tanh %330 : vector<2x128xf32>
    %337 = vector.extract_strided_slice %335 {offsets = [0, 0], sizes = [2, 32], strides = [1, 1]} : vector<2x128xf32> to vector<2x32xf32>
    %338 = vector.extract_strided_slice %335 {offsets = [0, 32], sizes = [2, 32], strides = [1, 1]} : vector<2x128xf32> to vector<2x32xf32>
    %339 = vector.extract_strided_slice %336 {offsets = [0, 64], sizes = [2, 32], strides = [1, 1]} : vector<2x128xf32> to vector<2x32xf32>
    %340 = vector.extract_strided_slice %335 {offsets = [0, 96], sizes = [2, 32], strides = [1, 1]} : vector<2x128xf32> to vector<2x32xf32>
    %341 = arith.mulf %338, %303 : vector<2x32xf32>
    %342 = arith.mulf %337, %339 : vector<2x32xf32>
    %343 = arith.addf %341, %342 : vector<2x32xf32>
    %344 = math.tanh %343 : vector<2x32xf32>
    %345 = arith.mulf %340, %344 : vector<2x32xf32>
    %c0_53 = arith.constant 0 : index
    %c0_54 = arith.constant 0 : index
    %c0_55 = arith.constant 0 : index
    %346 = vector.load %arg5[%c0_53, %c0_54, %c0_55] : memref<2x2x32xf32, #tpu.memory_space<vmem>>, vector<1x2x32xf32>
    %347 = vector.shape_cast %346 : vector<1x2x32xf32> to vector<2x32xf32>
    %348 = vector.shape_cast %325 : vector<2x32xf32> to vector<1x2x32xf32>
    tpu.vector_store %arg5[%c0_53, %c0_54, %c0_55], %348 {strides = array<i32>} : memref<2x2x32xf32, #tpu.memory_space<vmem>>, vector<1x2x32xf32>,
    %c0_56 = arith.constant 0 : index
    %c0_57 = arith.constant 0 : index
    %c0_58 = arith.constant 0 : index
    %349 = vector.load %arg6[%c0_56, %c0_57, %c0_58] : memref<2x2x32xf32, #tpu.memory_space<vmem>>, vector<1x2x32xf32>
    %350 = vector.shape_cast %349 : vector<1x2x32xf32> to vector<2x32xf32>
    %351 = vector.shape_cast %323 : vector<2x32xf32> to vector<1x2x32xf32>
    tpu.vector_store %arg6[%c0_56, %c0_57, %c0_58], %351 {strides = array<i32>} : memref<2x2x32xf32, #tpu.memory_space<vmem>>, vector<1x2x32xf32>,
    %c1_59 = arith.constant 1 : index
    %c0_60 = arith.constant 0 : index
    %c0_61 = arith.constant 0 : index
    %352 = vector.load %arg5[%c1_59, %c0_60, %c0_61] : memref<2x2x32xf32, #tpu.memory_space<vmem>>, vector<1x2x32xf32>
    %353 = vector.shape_cast %352 : vector<1x2x32xf32> to vector<2x32xf32>
    %354 = vector.shape_cast %345 : vector<2x32xf32> to vector<1x2x32xf32>
    tpu.vector_store %arg5[%c1_59, %c0_60, %c0_61], %354 {strides = array<i32>} : memref<2x2x32xf32, #tpu.memory_space<vmem>>, vector<1x2x32xf32>,
    %c1_62 = arith.constant 1 : index
    %c0_63 = arith.constant 0 : index
    %c0_64 = arith.constant 0 : index
    %355 = vector.load %arg6[%c1_62, %c0_63, %c0_64] : memref<2x2x32xf32, #tpu.memory_space<vmem>>, vector<1x2x32xf32>
    %356 = vector.shape_cast %355 : vector<1x2x32xf32> to vector<2x32xf32>
    %357 = vector.shape_cast %343 : vector<2x32xf32> to vector<1x2x32xf32>
    tpu.vector_store %arg6[%c1_62, %c0_63, %c0_64], %357 {strides = array<i32>} : memref<2x2x32xf32, #tpu.memory_space<vmem>>, vector<1x2x32xf32>,
    %358 = vector.shape_cast %65 : vector<2x32xf32> to vector<1x2x32xf32>
    %359 = vector.shape_cast %105 : vector<2x32xf32> to vector<1x2x32xf32>
    %360 = vector.shape_cast %145 : vector<2x32xf32> to vector<1x2x32xf32>
    %361 = vector.shape_cast %185 : vector<2x32xf32> to vector<1x2x32xf32>
    %362 = vector.shape_cast %225 : vector<2x32xf32> to vector<1x2x32xf32>
    %363 = vector.shape_cast %265 : vector<2x32xf32> to vector<1x2x32xf32>
    %364 = vector.shape_cast %305 : vector<2x32xf32> to vector<1x2x32xf32>
    %365 = vector.shape_cast %345 : vector<2x32xf32> to vector<1x2x32xf32>
    %366 = tpu.concatenate %358, %359, %360, %361, %362, %363, %364, %365 in 0 : vector<1x2x32xf32>, vector<1x2x32xf32>, vector<1x2x32xf32>, vector<1x2x32xf32>, vector<1x2x32xf32>, vector<1x2x32xf32>, vector<1x2x32xf32>, vector<1x2x32xf32> -> vector<8x2x32xf32>
    %367 = tpu.transpose %366, [1, 0, 2] : vector<8x2x32xf32> -> vector<2x8x32xf32>
    %368 = vector.shape_cast %367 : vector<2x8x32xf32> to vector<16x32xf32>
    %369 = arith.truncf %368 : vector<16x32xf32> to vector<16x32xbf16>
    %cst_65 = arith.constant dense<0.000000e+00> : vector<16x8xf32>
    %370 = tpu.matmul %369, %7, %cst_65 {dimension_numbers = #tpu.dot_dimension_numbers<[1], [0], [0], [1], [0, 0, 1, 1], [], []>} : vector<16x32xbf16>, vector<32x8xbf16>, vector<16x8xf32> -> vector<16x8xf32>
    %371 = vector.broadcast %9 : vector<1x8xf32> to vector<16x8xf32>
    %372 = arith.addf %370, %371 : vector<16x8xf32>
    %373 = vector.shape_cast %372 : vector<16x8xf32> to vector<2x8x8xf32>
    %c0_66 = arith.constant 0 : index
    %c0_67 = arith.constant 0 : index
    %c0_68 = arith.constant 0 : index
    %374 = vector.load %arg4[%c0_66, %c0_67, %c0_68] : memref<2x8x8xf32, #tpu.memory_space<vmem>>, vector<2x8x8xf32>
    tpu.vector_store %arg4[%c0_66, %c0_67, %c0_68], %373 {strides = array<i32>} : memref<2x8x8xf32, #tpu.memory_space<vmem>>, vector<2x8x8xf32>,
    return
  }
}

</mosaic_0001>

<llo_original>
// kernel: forward.1
$region0: #{forward.1}
  #allocation0 [shape = 'u32[]', space=smem, size = 0x4, offset = 0x4, fixed_abs, tag = 'smem constant byte address 0x4 - core index']
  #allocation1 [shape = 'u32[144,128]{1,0:T(1,128)}', space=vmem, size = 0x12000, scoped, tag = 'internal scratch']
  %s0 = inlined_call_operand.hbm [shape: f32[2,8,16], index: 0, kind: input, shape index: {}]
  %s1 = inlined_call_operand.hbm [shape: bf16[192,128], index: 1, kind: input, shape index: {}]
  %s2 = inlined_call_operand.hbm [shape: f32[2,2,32], index: 2, kind: input, shape index: {}]
  %s3 = inlined_call_operand.vmem [shape: f32[2,2,32], index: 3, kind: input, shape index: {}]
  %s4 = inlined_call_operand.hbm [shape: f32[2,8,8], index: 4, kind: output, shape index: {0}]
  %s5 = inlined_call_operand.hbm [shape: f32[2,2,32], index: 5, kind: output, shape index: {1}]
  %s6 = inlined_call_operand.hbm [shape: f32[2,2,32], index: 6, kind: output, shape index: {2}]
  %7 = xla_tuple %s4, %s5, %s6
  %s8 = sld [smem:[#allocation0]]
  $region54: #{forward.1} parent=0
    _
  %s10 = ssub.s32 1, %s8
  %s11 = scalar_select 0, %s10, %s8
  $region1: #{forward.1} parent=0
    #allocation2 [shape = 'u8[8192]{0}', space=vmem, size = 0x2000, scoped, tag = 'input window, operand 0, single buffered']
    #allocation3 [shape = 's32[1]{0}', space=sflag, size = 0x4, scoped, tag = 'scoped memory for forward.1']
    #allocation4 [shape = 's32[1]{0}', space=sflag, size = 0x4, scoped, tag = 'scoped memory for forward.1']
    #allocation5 [shape = 'u8[49152]{0}', space=vmem, size = 0xc000, scoped, tag = 'input window, operand 1, single buffered']
    #allocation6 [shape = 's32[1]{0}', space=sflag, size = 0x4, scoped, tag = 'scoped memory for forward.1']
    #allocation7 [shape = 'u8[2048]{0}', space=vmem, size = 0x800, scoped, tag = 'input window, operand 2, single buffered']
    #allocation8 [shape = 'u8[8192]{0}', space=vmem, size = 0x2000, scoped, tag = 'output window, operand 0, single buffered']
    #allocation9 [shape = 'u8[2048]{0}', space=vmem, size = 0x800, scoped, tag = 'output window, operand 1, single buffered']
    #allocation10 [shape = 's32[1]{0}', space=sflag, size = 0x4, scoped, tag = 'scoped memory for forward.1']
    #allocation11 [shape = 'u8[2048]{0}', space=vmem, size = 0x800, scoped, tag = 'output window, operand 2, single buffered']
    %12 = vsyncpa [#allocation3], 0
    %13 = vsyncpa [#allocation6], 0
    %14 = vsyncpa [#allocation4], 0
    %15 = vsyncpa [#allocation10], 0
    // Predicated region
    $region2: #{forward.1} parent=1 // pred_check
      _
    $region3: #{forward.1} parent=1 // pred_check_branch
      %17 = sbr.rel (0) target = $region5
    $region4: #{forward.1} parent=1 // pred_region
      %s19 = ssub.s32 256, 256
      %20 = vsyncadd [#allocation3], %s19
      %s21 = sshll.u32 [#allocation2], 4
      %s22 = int_to_ptr.vmem [resolvable:$true] %s21
      %27 = dma.hbm_to_vmem [thread:$0]  %s0, 256, %s22, [#allocation3], 128, 128, 8
    $region5: #{forward.1} parent=1 // pred_fallthru
      _
    // Predicated region
    $region6: #{forward.1} parent=1 // pred_check
      _
    $region7: #{forward.1} parent=1 // pred_check_branch
      %29 = sbr.rel (0) target = $region9
    $region8: #{forward.1} parent=1 // pred_region
      %s31 = ssub.s32 1536, 1536
      %32 = vsyncadd [#allocation6], %s31
      %s33 = sshll.u32 [#allocation5], 4
      %s34 = int_to_ptr.vmem [resolvable:$true] %s33
      %39 = dma.hbm_to_vmem [thread:$0]  %s1, 1536, %s34, [#allocation6], 64, 64, 4
    $region9: #{forward.1} parent=1 // pred_fallthru
      _
    // Predicated region
    $region10: #{forward.1} parent=1 // pred_check
      _
    $region11: #{forward.1} parent=1 // pred_check_branch
      %41 = sbr.rel (0) target = $region13
    $region12: #{forward.1} parent=1 // pred_region
      %s43 = ssub.s32 64, 64
      %44 = vsyncadd [#allocation6], %s43
      %s45 = sshll.u32 [#allocation7], 4
      %s46 = int_to_ptr.vmem [resolvable:$true] %s45
      %51 = dma.hbm_to_vmem [thread:$0]  %s2, 64, %s46, [#allocation6], 32, 32, 2
    $region13: #{forward.1} parent=1 // pred_fallthru
      _
    // Predicated region
    $region14: #{forward.1} parent=1 // pred_check
      _
    $region15: #{forward.1} parent=1 // pred_check_branch
      %53 = sbr.rel (0) target = $region17
    $region16: #{forward.1} parent=1 // pred_region
      _
    $region17: #{forward.1} parent=1 // pred_fallthru
      _
    // Predicated region
    $region18: #{forward.1} parent=1 // pred_check
      _
    $region19: #{forward.1} parent=1 // pred_check_branch
      %55 = sbr.rel (0) target = $region21
    $region20: #{forward.1} parent=1 // pred_region
      %56 = dma.done [#allocation3], 256
    $region21: #{forward.1} parent=1 // pred_fallthru
      _
    // Predicated region
    $region22: #{forward.1} parent=1 // pred_check
      _
    $region23: #{forward.1} parent=1 // pred_check_branch
      %58 = sbr.rel (0) target = $region25
    $region24: #{forward.1} parent=1 // pred_region
      %59 = dma.done [#allocation6], 1536
    $region25: #{forward.1} parent=1 // pred_fallthru
      _
    // Predicated region
    $region26: #{forward.1} parent=1 // pred_check
      _
    $region27: #{forward.1} parent=1 // pred_check_branch
      %61 = sbr.rel (0) target = $region29
    $region28: #{forward.1} parent=1 // pred_region
      %62 = dma.done [#allocation6], 64
    $region29: #{forward.1} parent=1 // pred_fallthru
      _
    %v64 = vld [vmem:[#allocation5] sm:$0xf]
    %v65 = vld [vmem:[#allocation5 + $0x4] sm:$0xf]
    %v66 = vld [vmem:[#allocation5 + $0x8] sm:$0xf]
    %v67 = vld [vmem:[#allocation5 + $0xc] sm:$0xf]
    %v68 = vld [vmem:[#allocation5 + $0x10] sm:$0xf]
    %v69 = vld [vmem:[#allocation5 + $0x14] sm:$0xf]
    %v70 = vld [vmem:[#allocation5 + $0x18] sm:$0x1]
    %v71 = vunpack.c.l.bf16 %v70
    %v72 = vld [vmem:[#allocation5 + $0x20] sm:$0xf]
    %v73 = vld [vmem:[#allocation5 + $0x24] sm:$0xf]
    %v74 = vld [vmem:[#allocation5 + $0x28] sm:$0xf]
    %v75 = vld [vmem:[#allocation5 + $0x2c] sm:$0xf]
    %v76 = vld [vmem:[#allocation5 + $0x30] sm:$0xf]
    %v77 = vld [vmem:[#allocation5 + $0x34] sm:$0xf]
    %v78 = vld [vmem:[#allocation5 + $0x38] sm:$0xf]
    %v79 = vld [vmem:[#allocation5 + $0x3c] sm:$0xf]
    %v80 = vld [vmem:[#allocation5 + $0x40] sm:$0x1]
    %v81 = vunpack.c.l.bf16 %v80
    %v82 = vld [vmem:[#allocation5 + $0x48] sm:$0xf]
    %v83 = vld [vmem:[#allocation5 + $0x4c] sm:$0xf]
    %v84 = vld [vmem:[#allocation5 + $0x50] sm:$0xf]
    %v85 = vld [vmem:[#allocation5 + $0x54] sm:$0xf]
    %v86 = vld [vmem:[#allocation5 + $0x58] sm:$0x1]
    %v87 = vunpack.c.l.bf16 %v86
    %v88 = vld [vmem:[#allocation2] sm:$0xff]
    %v89 = vld [vmem:[#allocation2 + $0x8] sm:$0xff]
    %v90 = vpack.c.bf16 %v89, %v88
    %v91 = vlaneseq
    %v92 = vshrl.u32 %v91, 7
    %v93 = vsub.s32 0, %v92
    %v94 = vrot.slane %v71, %v93
    %v97 = vunpack.c.l.b16 %v64
    %v98 = vunpack.c.l.b16 %v65
    %v99 = vpack.c.b16 %v98, %v97
    %vm101 = vcmask 130048
    %v103 = vsel %vm101, %v90, 0
    %105 = vmatprep.subr.bf16.mxu0 0
    %106 = vmatpush1.bf16.msra.mxu0 %v99
    %107 = vmatprep.subr.bf16.mxu0 0
    %108 = vmatpush1.bf16.msra.mxu0 0
    %109 = vmatprep.subr.bf16.mxu0 0
    %110 = vmatpush1.bf16.msra.mxu0 0
    %111 = vmatprep.subr.bf16.mxu0 0
    %112 = vmatpush1.bf16.msra.mxu0 0
    %113 = vmatprep.subr.bf16.mxu0 0
    %114 = vmatpush1.bf16.msra.mxu0 0
    %115 = vmatprep.subr.bf16.mxu0 0
    %116 = vmatpush1.bf16.msra.mxu0 0
    %117 = vmatprep.subr.bf16.mxu0 0
    %118 = vmatpush1.bf16.msra.mxu0 0
    %119 = vmatprep.subr.bf16.mxu0 0
    %120 = vmatpush1.bf16.msra.mxu0 0
    %121 = vmatprep.subr.bf16.mxu0 0
    %122 = vmatpush1.bf16.msra.mxu0 0
    %123 = vmatprep.subr.bf16.mxu0 0
    %124 = vmatpush1.bf16.msra.mxu0 0
    %125 = vmatprep.subr.bf16.mxu0 0
    %126 = vmatpush1.bf16.msra.mxu0 0
    %127 = vmatprep.subr.bf16.mxu0 0
    %128 = vmatpush1.bf16.msra.mxu0 0
    %129 = vmatprep.subr.bf16.mxu0 0
    %130 = vmatpush1.bf16.msra.mxu0 0
    %131 = vmatprep.subr.bf16.mxu0 0
    %132 = vmatpush1.bf16.msra.mxu0 0
    %133 = vmatprep.subr.bf16.mxu0 0
    %134 = vmatpush1.bf16.msra.mxu0 0
    %135 = vmatprep.subr.bf16.mxu0 0
    %136 = vmatpush1.bf16.msra.mxu0 0
    %137 = vmatprep.mubr.bf16.mxu0 0
    %138 = vmatmul.mubr.bf16.gmra.mrb[0].mxu0 %v103
    %v139 = vpop.f32.mrb[0].mxu0
    %v140 = vadd.f32 %v94, %v139
    %v141 = vpop.f32.mrb[0].mxu0
    %v142 = vpop.f32.mrb[0].mxu0
    %v143 = vadd.f32 %v94, %v142
    %v144 = vpop.f32.mrb[0].mxu0
    %145 = vdwg.mxu0
    %v146 = vcombine.high %v140, 0.0
    %v148 = vunpack.c.l.s4 1983009808
    %v149 = vunpack.c.0.s8 %v148
    %v150 = vlaneseq
    %v151 = vshrl.u32 %v150, 7
    %v152 = vsub.s32 %v149, %v151
    %v153 = vrot.slane %v140, %v152
    %v155 = vunpack.c.l.s4 1983009808
    %v156 = vunpack.c.0.s8 %v155
    %v157 = vlaneseq
    %v158 = vshrl.u32 %v157, 7
    %v159 = vsub.s32 %v156, %v158
    %v160 = vrot.slane %v146, %v159
    %v161 = vcombine.high %v143, 0.0
    %v163 = vunpack.c.l.s4 1983009808
    %v164 = vunpack.c.0.s8 %v163
    %v165 = vlaneseq
    %v166 = vshrl.u32 %v165, 7
    %v167 = vsub.s32 %v164, %v166
    %v168 = vrot.slane %v143, %v167
    %v170 = vunpack.c.l.s4 1983009808
    %v171 = vunpack.c.0.s8 %v170
    %v172 = vlaneseq
    %v173 = vshrl.u32 %v172, 7
    %v174 = vsub.s32 %v171, %v173
    %v175 = vrot.slane %v161, %v174
    %v176 = vcombine.low %v153, %v168
    %v177 = vcombine.high %v153, %v168
    %v179 = vunpack.c.l.s4 1934713408
    %v180 = vunpack.c.0.s8 %v179
    %v181 = vlaneseq
    %v182 = vshrl.u32 %v181, 7
    %v183 = vsub.s32 %v180, %v182
    %v184 = vrot.slane %v176, %v183
    %v186 = vunpack.c.l.s4 1934713408
    %v187 = vunpack.c.0.s8 %v186
    %v188 = vlaneseq
    %v189 = vshrl.u32 %v188, 7
    %v190 = vsub.s32 %v187, %v189
    %v191 = vrot.slane %v177, %v190
    %v192 = vcombine.low %v160, %v175
    %v193 = vcombine.high %v160, %v175
    %v195 = vunpack.c.l.s4 1934713408
    %v196 = vunpack.c.0.s8 %v195
    %v197 = vlaneseq
    %v198 = vshrl.u32 %v197, 7
    %v199 = vsub.s32 %v196, %v198
    %v200 = vrot.slane %v192, %v199
    %v202 = vunpack.c.l.s4 1934713408
    %v203 = vunpack.c.0.s8 %v202
    %v204 = vlaneseq
    %v205 = vshrl.u32 %v204, 7
    %v206 = vsub.s32 %v203, %v205
    %v207 = vrot.slane %v193, %v206
    %v208 = vcombine.high %v184, 0.0
    %v209 = vcombine.high %v191, 0.0
    %v210 = vcombine.high %v200, 0.0
    %v211 = vcombine.high %v207, 0.0
    %v212 = vld [vmem:[#allocation7] sm:$0x3]
    %s213 = scalar_lea.vmem [#allocation7], 2
    %v214 = vld [vmem:[%s213] sm:$0x3]
    %v215 = vld [vmem:[%s3] sm:$0x3]
    %s216 = scalar_lea.vmem %s3, 2
    %v217 = vld [vmem:[%s216] sm:$0x3]
    %v218 = vpack.c.bf16 %v212, %v212
    %v223 = vunpack.c.l.b16 %v66
    %v224 = vunpack.c.l.b16 %v67
    %v225 = vunpack.c.l.b16 %v68
    %v226 = vunpack.c.l.b16 %v69
    %v227 = vpack.c.b16 %v224, %v223
    %v228 = vpack.c.b16 %v226, %v225
    %vm231 = vcmask 261120
    %v233 = vsel %vm231, %v218, 0
    %235 = vmatprep.subr.bf16.mxu0 0
    %236 = vmatpush1.bf16.msra.mxu0 %v227
    %237 = vmatprep.subr.bf16.mxu0 0
    %238 = vmatpush1.bf16.msra.mxu0 %v228
    %239 = vmatprep.subr.bf16.mxu0 0
    %240 = vmatpush1.bf16.msra.mxu0 0
    %241 = vmatprep.subr.bf16.mxu0 0
    %242 = vmatpush1.bf16.msra.mxu0 0
    %243 = vmatprep.subr.bf16.mxu0 0
    %244 = vmatpush1.bf16.msra.mxu0 0
    %245 = vmatprep.subr.bf16.mxu0 0
    %246 = vmatpush1.bf16.msra.mxu0 0
    %247 = vmatprep.subr.bf16.mxu0 0
    %248 = vmatpush1.bf16.msra.mxu0 0
    %249 = vmatprep.subr.bf16.mxu0 0
    %250 = vmatpush1.bf16.msra.mxu0 0
    %251 = vmatprep.subr.bf16.mxu0 0
    %252 = vmatpush1.bf16.msra.mxu0 0
    %253 = vmatprep.subr.bf16.mxu0 0
    %254 = vmatpush1.bf16.msra.mxu0 0
    %255 = vmatprep.subr.bf16.mxu0 0
    %256 = vmatpush1.bf16.msra.mxu0 0
    %257 = vmatprep.subr.bf16.mxu0 0
    %258 = vmatpush1.bf16.msra.mxu0 0
    %259 = vmatprep.subr.bf16.mxu0 0
    %260 = vmatpush1.bf16.msra.mxu0 0
    %261 = vmatprep.subr.bf16.mxu0 0
    %262 = vmatpush1.bf16.msra.mxu0 0
    %263 = vmatprep.subr.bf16.mxu0 0
    %264 = vmatpush1.bf16.msra.mxu0 0
    %265 = vmatprep.subr.bf16.mxu0 0
    %266 = vmatpush1.bf16.msra.mxu0 0
    %267 = vmatprep.mubr.bf16.mxu0 0
    %268 = vmatmul.mubr.bf16.gmra.mrb[0].mxu0 %v233
    %v269 = vpop.f32.mrb[0].mxu0
    %v270 = vadd.f32 0.0, %v269
    %v271 = vpop.f32.mrb[0].mxu0
    %v272 = vpop.f32.mrb[0].mxu0
    %v273 = vpop.f32.mrb[0].mxu0
    %274 = vdwg.mxu0
    %v275 = vadd.f32 %v184, %v270
    %v276 = vxor.u32 %v275, 2147483648
    %v277 = vmul.f32 %v276, 1.442695
    %v278 = vpow.pop %v277
    %v279 = vadd.f32 %v278, 1.0
    %v280 = vrcp.pop %v279
    %v281 = vmul.f32 1.0, %v280
    %v282 = vtanh.pop %v275
    %284 = vrot.lane.b32.xlu0 %v215, 32
    %v285 = vpop.permute.xlu0 %284
    %v287 = vmul.f32 %v281, %v285
    %289 = vrot.lane.b32.xlu0 %v282, 64
    %v290 = vpop.permute.xlu0 %289
    %v292 = vmul.f32 %v281, %v290
    %294 = vrot.lane.b32.xlu0 %v292, 32
    %v295 = vpop.permute.xlu0 %294
    %v297 = vadd.f32 %v287, %v295
    %v298 = vtanh.pop %v297
    %300 = vrot.lane.b32.xlu0 %v298, 64
    %v301 = vpop.permute.xlu0 %300
    %v303 = vmul.f32 %v281, %v301
    %305 = vrot.lane.b32.xlu0 %v303, 32
    %v306 = vpop.permute.xlu0 %305
    %309 = vrot.lane.b32.xlu0 %v214, 32
    %v310 = vpop.permute.xlu0 %309
    %v312 = vsel %vm231, %v306, %v310
    %v313 = vpack.c.bf16 %v312, %v312
    %v314 = vlaneseq
    %v315 = vshrl.u32 %v314, 7
    %v316 = vsub.s32 0, %v315
    %v317 = vrot.slane %v81, %v316
    %v326 = vunpack.c.l.b16 %v72
    %v327 = vunpack.c.l.b16 %v73
    %v328 = vunpack.c.l.b16 %v74
    %v329 = vunpack.c.l.b16 %v75
    %v330 = vunpack.c.l.b16 %v76
    %v331 = vunpack.c.l.b16 %v77
    %v332 = vunpack.c.l.b16 %v78
    %v333 = vunpack.c.l.b16 %v79
    %v334 = vpack.c.b16 %v327, %v326
    %v335 = vpack.c.b16 %v329, %v328
    %v336 = vpack.c.b16 %v331, %v330
    %v337 = vpack.c.b16 %v333, %v332
    %vm342 = vcmask 523264
    %v344 = vsel %vm342, %v313, 0
    %346 = vmatprep.subr.bf16.mxu0 0
    %347 = vmatpush1.bf16.msra.mxu0 %v334
    %348 = vmatprep.subr.bf16.mxu0 0
    %349 = vmatpush1.bf16.msra.mxu0 %v335
    %350 = vmatprep.subr.bf16.mxu0 0
    %351 = vmatpush1.bf16.msra.mxu0 %v336
    %352 = vmatprep.subr.bf16.mxu0 0
    %353 = vmatpush1.bf16.msra.mxu0 %v337
    %354 = vmatprep.subr.bf16.mxu0 0
    %355 = vmatpush1.bf16.msra.mxu0 0
    %356 = vmatprep.subr.bf16.mxu0 0
    %357 = vmatpush1.bf16.msra.mxu0 0
    %358 = vmatprep.subr.bf16.mxu0 0
    %359 = vmatpush1.bf16.msra.mxu0 0
    %360 = vmatprep.subr.bf16.mxu0 0
    %361 = vmatpush1.bf16.msra.mxu0 0
    %362 = vmatprep.subr.bf16.mxu0 0
    %363 = vmatpush1.bf16.msra.mxu0 0
    %364 = vmatprep.subr.bf16.mxu0 0
    %365 = vmatpush1.bf16.msra.mxu0 0
    %366 = vmatprep.subr.bf16.mxu0 0
    %367 = vmatpush1.bf16.msra.mxu0 0
    %368 = vmatprep.subr.bf16.mxu0 0
    %369 = vmatpush1.bf16.msra.mxu0 0
    %370 = vmatprep.subr.bf16.mxu0 0
    %371 = vmatpush1.bf16.msra.mxu0 0
    %372 = vmatprep.subr.bf16.mxu0 0
    %373 = vmatpush1.bf16.msra.mxu0 0
    %374 = vmatprep.subr.bf16.mxu0 0
    %375 = vmatpush1.bf16.msra.mxu0 0
    %376 = vmatprep.subr.bf16.mxu0 0
    %377 = vmatpush1.bf16.msra.mxu0 0
    %378 = vmatprep.mubr.bf16.mxu0 0
    %379 = vmatmul.mubr.bf16.gmra.mrb[0].mxu0 %v344
    %v380 = vpop.f32.mrb[0].mxu0
    %v381 = vadd.f32 %v317, %v380
    %v382 = vpop.f32.mrb[0].mxu0
    %v383 = vpop.f32.mrb[0].mxu0
    %v384 = vpop.f32.mrb[0].mxu0
    %385 = vdwg.mxu0
    %v386 = vxor.u32 %v381, 2147483648
    %v387 = vmul.f32 %v386, 1.442695
    %v388 = vpow.pop %v387
    %v389 = vadd.f32 %v388, 1.0
    %v390 = vrcp.pop %v389
    %v391 = vmul.f32 1.0, %v390
    %v392 = vtanh.pop %v381
    %394 = vrot.lane.b32.xlu0 %v217, 32
    %v395 = vpop.permute.xlu0 %394
    %v397 = vmul.f32 %v391, %v395
    %399 = vrot.lane.b32.xlu0 %v392, 64
    %v400 = vpop.permute.xlu0 %399
    %v402 = vmul.f32 %v391, %v400
    %404 = vrot.lane.b32.xlu0 %v402, 32
    %v405 = vpop.permute.xlu0 %404
    %v407 = vadd.f32 %v397, %v405
    %v408 = vtanh.pop %v407
    %410 = vrot.lane.b32.xlu0 %v408, 64
    %v411 = vpop.permute.xlu0 %410
    %v413 = vmul.f32 %v391, %v411
    %v414 = vpack.c.bf16 %v303, %v303
    %416 = vrot.lane.b32.xlu0 %v414, 32
    %v417 = vpop.permute.xlu0 %416
    %v419 = vsel %vm231, %v417, 0
    %421 = vmatprep.subr.bf16.mxu0 0
    %422 = vmatpush1.bf16.msra.mxu0 %v227
    %423 = vmatprep.subr.bf16.mxu0 0
    %424 = vmatpush1.bf16.msra.mxu0 %v228
    %425 = vmatprep.subr.bf16.mxu0 0
    %426 = vmatpush1.bf16.msra.mxu0 0
    %427 = vmatprep.subr.bf16.mxu0 0
    %428 = vmatpush1.bf16.msra.mxu0 0
    %429 = vmatprep.subr.bf16.mxu0 0
    %430 = vmatpush1.bf16.msra.mxu0 0
    %431 = vmatprep.subr.bf16.mxu0 0
    %432 = vmatpush1.bf16.msra.mxu0 0
    %433 = vmatprep.subr.bf16.mxu0 0
    %434 = vmatpush1.bf16.msra.mxu0 0
    %435 = vmatprep.subr.bf16.mxu0 0
    %436 = vmatpush1.bf16.msra.mxu0 0
    %437 = vmatprep.subr.bf16.mxu0 0
    %438 = vmatpush1.bf16.msra.mxu0 0
    %439 = vmatprep.subr.bf16.mxu0 0
    %440 = vmatpush1.bf16.msra.mxu0 0
    %441 = vmatprep.subr.bf16.mxu0 0
    %442 = vmatpush1.bf16.msra.mxu0 0
    %443 = vmatprep.subr.bf16.mxu0 0
    %444 = vmatpush1.bf16.msra.mxu0 0
    %445 = vmatprep.subr.bf16.mxu0 0
    %446 = vmatpush1.bf16.msra.mxu0 0
    %447 = vmatprep.subr.bf16.mxu0 0
    %448 = vmatpush1.bf16.msra.mxu0 0
    %449 = vmatprep.subr.bf16.mxu0 0
    %450 = vmatpush1.bf16.msra.mxu0 0
    %451 = vmatprep.subr.bf16.mxu0 0
    %452 = vmatpush1.bf16.msra.mxu0 0
    %453 = vmatprep.mubr.bf16.mxu0 0
    %454 = vmatmul.mubr.bf16.gmra.mrb[0].mxu0 %v419
    %v455 = vpop.f32.mrb[0].mxu0
    %v456 = vadd.f32 0.0, %v455
    %v457 = vpop.f32.mrb[0].mxu0
    %v458 = vpop.f32.mrb[0].mxu0
    %v459 = vpop.f32.mrb[0].mxu0
    %460 = vdwg.mxu0
    %v461 = vadd.f32 %v208, %v456
    %v462 = vxor.u32 %v461, 2147483648
    %v463 = vmul.f32 %v462, 1.442695
    %v464 = vpow.pop %v463
    %v465 = vadd.f32 %v464, 1.0
    %v466 = vrcp.pop %v465
    %v467 = vmul.f32 1.0, %v466
    %v468 = vtanh.pop %v461
    %v469 = vmul.f32 %v467, %v297
    %471 = vrot.lane.b32.xlu0 %v468, 64
    %v472 = vpop.permute.xlu0 %471
    %v474 = vmul.f32 %v467, %v472
    %476 = vrot.lane.b32.xlu0 %v474, 32
    %v477 = vpop.permute.xlu0 %476
    %v479 = vadd.f32 %v469, %v477
    %v480 = vtanh.pop %v479
    %482 = vrot.lane.b32.xlu0 %v480, 64
    %v483 = vpop.permute.xlu0 %482
    %v485 = vmul.f32 %v467, %v483
    %487 = vrot.lane.b32.xlu0 %v485, 32
    %v488 = vpop.permute.xlu0 %487
    %491 = vrot.lane.b32.xlu0 %v413, 64
    %v492 = vpop.permute.xlu0 %491
    %v494 = vsel %vm231, %v488, %v492
    %v495 = vpack.c.bf16 %v494, %v494
    %v497 = vsel %vm342, %v495, 0
    %499 = vmatprep.subr.bf16.mxu0 0
    %500 = vmatpush1.bf16.msra.mxu0 %v334
    %501 = vmatprep.subr.bf16.mxu0 0
    %502 = vmatpush1.bf16.msra.mxu0 %v335
    %503 = vmatprep.subr.bf16.mxu0 0
    %504 = vmatpush1.bf16.msra.mxu0 %v336
    %505 = vmatprep.subr.bf16.mxu0 0
    %506 = vmatpush1.bf16.msra.mxu0 %v337
    %507 = vmatprep.subr.bf16.mxu0 0
    %508 = vmatpush1.bf16.msra.mxu0 0
    %509 = vmatprep.subr.bf16.mxu0 0
    %510 = vmatpush1.bf16.msra.mxu0 0
    %511 = vmatprep.subr.bf16.mxu0 0
    %512 = vmatpush1.bf16.msra.mxu0 0
    %513 = vmatprep.subr.bf16.mxu0 0
    %514 = vmatpush1.bf16.msra.mxu0 0
    %515 = vmatprep.subr.bf16.mxu0 0
    %516 = vmatpush1.bf16.msra.mxu0 0
    %517 = vmatprep.subr.bf16.mxu0 0
    %518 = vmatpush1.bf16.msra.mxu0 0
    %519 = vmatprep.subr.bf16.mxu0 0
    %520 = vmatpush1.bf16.msra.mxu0 0
    %521 = vmatprep.subr.bf16.mxu0 0
    %522 = vmatpush1.bf16.msra.mxu0 0
    %523 = vmatprep.subr.bf16.mxu0 0
    %524 = vmatpush1.bf16.msra.mxu0 0
    %525 = vmatprep.subr.bf16.mxu0 0
    %526 = vmatpush1.bf16.msra.mxu0 0
    %527 = vmatprep.subr.bf16.mxu0 0
    %528 = vmatpush1.bf16.msra.mxu0 0
    %529 = vmatprep.subr.bf16.mxu0 0
    %530 = vmatpush1.bf16.msra.mxu0 0
    %531 = vmatprep.mubr.bf16.mxu0 0
    %532 = vmatmul.mubr.bf16.gmra.mrb[0].mxu0 %v497
    %v533 = vpop.f32.mrb[0].mxu0
    %v534 = vadd.f32 %v317, %v533
    %v535 = vpop.f32.mrb[0].mxu0
    %v536 = vpop.f32.mrb[0].mxu0
    %v537 = vpop.f32.mrb[0].mxu0
    %538 = vdwg.mxu0
    %v539 = vxor.u32 %v534, 2147483648
    %v540 = vmul.f32 %v539, 1.442695
    %v541 = vpow.pop %v540
    %v542 = vadd.f32 %v541, 1.0
    %v543 = vrcp.pop %v542
    %v544 = vmul.f32 1.0, %v543
    %v545 = vtanh.pop %v534
    %v546 = vmul.f32 %v544, %v407
    %548 = vrot.lane.b32.xlu0 %v545, 64
    %v549 = vpop.permute.xlu0 %548
    %v551 = vmul.f32 %v544, %v549
    %553 = vrot.lane.b32.xlu0 %v551, 32
    %v554 = vpop.permute.xlu0 %553
    %v556 = vadd.f32 %v546, %v554
    %v557 = vtanh.pop %v556
    %559 = vrot.lane.b32.xlu0 %v557, 64
    %v560 = vpop.permute.xlu0 %559
    %v562 = vmul.f32 %v544, %v560
    %v563 = vpack.c.bf16 %v485, %v485
    %565 = vrot.lane.b32.xlu0 %v563, 32
    %v566 = vpop.permute.xlu0 %565
    %v568 = vsel %vm231, %v566, 0
    %570 = vmatprep.subr.bf16.mxu0 0
    %571 = vmatpush1.bf16.msra.mxu0 %v227
    %572 = vmatprep.subr.bf16.mxu0 0
    %573 = vmatpush1.bf16.msra.mxu0 %v228
    %574 = vmatprep.subr.bf16.mxu0 0
    %575 = vmatpush1.bf16.msra.mxu0 0
    %576 = vmatprep.subr.bf16.mxu0 0
    %577 = vmatpush1.bf16.msra.mxu0 0
    %578 = vmatprep.subr.bf16.mxu0 0
    %579 = vmatpush1.bf16.msra.mxu0 0
    %580 = vmatprep.subr.bf16.mxu0 0
    %581 = vmatpush1.bf16.msra.mxu0 0
    %582 = vmatprep.subr.bf16.mxu0 0
    %583 = vmatpush1.bf16.msra.mxu0 0
    %584 = vmatprep.subr.bf16.mxu0 0
    %585 = vmatpush1.bf16.msra.mxu0 0
    %586 = vmatprep.subr.bf16.mxu0 0
    %587 = vmatpush1.bf16.msra.mxu0 0
    %588 = vmatprep.subr.bf16.mxu0 0
    %589 = vmatpush1.bf16.msra.mxu0 0
    %590 = vmatprep.subr.bf16.mxu0 0
    %591 = vmatpush1.bf16.msra.mxu0 0
    %592 = vmatprep.subr.bf16.mxu0 0
    %593 = vmatpush1.bf16.msra.mxu0 0
    %594 = vmatprep.subr.bf16.mxu0 0
    %595 = vmatpush1.bf16.msra.mxu0 0
    %596 = vmatprep.subr.bf16.mxu0 0
    %597 = vmatpush1.bf16.msra.mxu0 0
    %598 = vmatprep.subr.bf16.mxu0 0
    %599 = vmatpush1.bf16.msra.mxu0 0
    %600 = vmatprep.subr.bf16.mxu0 0
    %601 = vmatpush1.bf16.msra.mxu0 0
    %602 = vmatprep.mubr.bf16.mxu0 0
    %603 = vmatmul.mubr.bf16.gmra.mrb[0].mxu0 %v568
    %v604 = vpop.f32.mrb[0].mxu0
    %v605 = vadd.f32 0.0, %v604
    %v606 = vpop.f32.mrb[0].mxu0
    %v607 = vpop.f32.mrb[0].mxu0
    %v608 = vpop.f32.mrb[0].mxu0
    %609 = vdwg.mxu0
    %v610 = vadd.f32 %v191, %v605
    %v611 = vxor.u32 %v610, 2147483648
    %v612 = vmul.f32 %v611, 1.442695
    %v613 = vpow.pop %v612
    %v614 = vadd.f32 %v613, 1.0
    %v615 = vrcp.pop %v614
    %v616 = vmul.f32 1.0, %v615
    %v617 = vtanh.pop %v610
    %v618 = vmul.f32 %v616, %v479
    %620 = vrot.lane.b32.xlu0 %v617, 64
    %v621 = vpop.permute.xlu0 %620
    %v623 = vmul.f32 %v616, %v621
    %625 = vrot.lane.b32.xlu0 %v623, 32
    %v626 = vpop.permute.xlu0 %625
    %v628 = vadd.f32 %v618, %v626
    %v629 = vtanh.pop %v628
    %631 = vrot.lane.b32.xlu0 %v629, 64
    %v632 = vpop.permute.xlu0 %631
    %v634 = vmul.f32 %v616, %v632
    %636 = vrot.lane.b32.xlu0 %v634, 32
    %v637 = vpop.permute.xlu0 %636
    %640 = vrot.lane.b32.xlu0 %v562, 64
    %v641 = vpop.permute.xlu0 %640
    %v643 = vsel %vm231, %v637, %v641
    %v644 = vpack.c.bf16 %v643, %v643
    %v646 = vsel %vm342, %v644, 0
    %648 = vmatprep.subr.bf16.mxu0 0
    %649 = vmatpush1.bf16.msra.mxu0 %v334
    %650 = vmatprep.subr.bf16.mxu0 0
    %651 = vmatpush1.bf16.msra.mxu0 %v335
    %652 = vmatprep.subr.bf16.mxu0 0
    %653 = vmatpush1.bf16.msra.mxu0 %v336
    %654 = vmatprep.subr.bf16.mxu0 0
    %655 = vmatpush1.bf16.msra.mxu0 %v337
    %656 = vmatprep.subr.bf16.mxu0 0
    %657 = vmatpush1.bf16.msra.mxu0 0
    %658 = vmatprep.subr.bf16.mxu0 0
    %659 = vmatpush1.bf16.msra.mxu0 0
    %660 = vmatprep.subr.bf16.mxu0 0
    %661 = vmatpush1.bf16.msra.mxu0 0
    %662 = vmatprep.subr.bf16.mxu0 0
    %663 = vmatpush1.bf16.msra.mxu0 0
    %664 = vmatprep.subr.bf16.mxu0 0
    %665 = vmatpush1.bf16.msra.mxu0 0
    %666 = vmatprep.subr.bf16.mxu0 0
    %667 = vmatpush1.bf16.msra.mxu0 0
    %668 = vmatprep.subr.bf16.mxu0 0
    %669 = vmatpush1.bf16.msra.mxu0 0
    %670 = vmatprep.subr.bf16.mxu0 0
    %671 = vmatpush1.bf16.msra.mxu0 0
    %672 = vmatprep.subr.bf16.mxu0 0
    %673 = vmatpush1.bf16.msra.mxu0 0
    %674 = vmatprep.subr.bf16.mxu0 0
    %675 = vmatpush1.bf16.msra.mxu0 0
    %676 = vmatprep.subr.bf16.mxu0 0
    %677 = vmatpush1.bf16.msra.mxu0 0
    %678 = vmatprep.subr.bf16.mxu0 0
    %679 = vmatpush1.bf16.msra.mxu0 0
    %680 = vmatprep.mubr.bf16.mxu0 0
    %681 = vmatmul.mubr.bf16.gmra.mrb[0].mxu0 %v646
    %v682 = vpop.f32.mrb[0].mxu0
    %v683 = vadd.f32 %v317, %v682
    %v684 = vpop.f32.mrb[0].mxu0
    %v685 = vpop.f32.mrb[0].mxu0
    %v686 = vpop.f32.mrb[0].mxu0
    %687 = vdwg.mxu0
    %v688 = vxor.u32 %v683, 2147483648
    %v689 = vmul.f32 %v688, 1.442695
    %v690 = vpow.pop %v689
    %v691 = vadd.f32 %v690, 1.0
    %v692 = vrcp.pop %v691
    %v693 = vmul.f32 1.0, %v692
    %v694 = vtanh.pop %v683
    %v695 = vmul.f32 %v693, %v556
    %697 = vrot.lane.b32.xlu0 %v694, 64
    %v698 = vpop.permute.xlu0 %697
    %v700 = vmul.f32 %v693, %v698
    %702 = vrot.lane.b32.xlu0 %v700, 32
    %v703 = vpop.permute.xlu0 %702
    %v705 = vadd.f32 %v695, %v703
    %v706 = vtanh.pop %v705
    %708 = vrot.lane.b32.xlu0 %v706, 64
    %v709 = vpop.permute.xlu0 %708
    %v711 = vmul.f32 %v693, %v709
    %v712 = vpack.c.bf16 %v634, %v634
    %714 = vrot.lane.b32.xlu0 %v712, 32
    %v715 = vpop.permute.xlu0 %714
    %v717 = vsel %vm231, %v715, 0
    %719 = vmatprep.subr.bf16.mxu0 0
    %720 = vmatpush1.bf16.msra.mxu0 %v227
    %721 = vmatprep.subr.bf16.mxu0 0
    %722 = vmatpush1.bf16.msra.mxu0 %v228
    %723 = vmatprep.subr.bf16.mxu0 0
    %724 = vmatpush1.bf16.msra.mxu0 0
    %725 = vmatprep.subr.bf16.mxu0 0
    %726 = vmatpush1.bf16.msra.mxu0 0
    %727 = vmatprep.subr.bf16.mxu0 0
    %728 = vmatpush1.bf16.msra.mxu0 0
    %729 = vmatprep.subr.bf16.mxu0 0
    %730 = vmatpush1.bf16.msra.mxu0 0
    %731 = vmatprep.subr.bf16.mxu0 0
    %732 = vmatpush1.bf16.msra.mxu0 0
    %733 = vmatprep.subr.bf16.mxu0 0
    %734 = vmatpush1.bf16.msra.mxu0 0
    %735 = vmatprep.subr.bf16.mxu0 0
    %736 = vmatpush1.bf16.msra.mxu0 0
    %737 = vmatprep.subr.bf16.mxu0 0
    %738 = vmatpush1.bf16.msra.mxu0 0
    %739 = vmatprep.subr.bf16.mxu0 0
    %740 = vmatpush1.bf16.msra.mxu0 0
    %741 = vmatprep.subr.bf16.mxu0 0
    %742 = vmatpush1.bf16.msra.mxu0 0
    %743 = vmatprep.subr.bf16.mxu0 0
    %744 = vmatpush1.bf16.msra.mxu0 0
    %745 = vmatprep.subr.bf16.mxu0 0
    %746 = vmatpush1.bf16.msra.mxu0 0
    %747 = vmatprep.subr.bf16.mxu0 0
    %748 = vmatpush1.bf16.msra.mxu0 0
    %749 = vmatprep.subr.bf16.mxu0 0
    %750 = vmatpush1.bf16.msra.mxu0 0
    %751 = vmatprep.mubr.bf16.mxu0 0
    %752 = vmatmul.mubr.bf16.gmra.mrb[0].mxu0 %v717
    %v753 = vpop.f32.mrb[0].mxu0
    %v754 = vadd.f32 0.0, %v753
    %v755 = vpop.f32.mrb[0].mxu0
    %v756 = vpop.f32.mrb[0].mxu0
    %v757 = vpop.f32.mrb[0].mxu0
    %758 = vdwg.mxu0
    %v759 = vadd.f32 %v209, %v754
    %v760 = vxor.u32 %v759, 2147483648
    %v761 = vmul.f32 %v760, 1.442695
    %v762 = vpow.pop %v761
    %v763 = vadd.f32 %v762, 1.0
    %v764 = vrcp.pop %v763
    %v765 = vmul.f32 1.0, %v764
    %v766 = vtanh.pop %v759
    %v767 = vmul.f32 %v765, %v628
    %769 = vrot.lane.b32.xlu0 %v766, 64
    %v770 = vpop.permute.xlu0 %769
    %v772 = vmul.f32 %v765, %v770
    %774 = vrot.lane.b32.xlu0 %v772, 32
    %v775 = vpop.permute.xlu0 %774
    %v777 = vadd.f32 %v767, %v775
    %v778 = vtanh.pop %v777
    %780 = vrot.lane.b32.xlu0 %v778, 64
    %v781 = vpop.permute.xlu0 %780
    %v783 = vmul.f32 %v765, %v781
    %785 = vrot.lane.b32.xlu0 %v783, 32
    %v786 = vpop.permute.xlu0 %785
    %789 = vrot.lane.b32.xlu0 %v711, 64
    %v790 = vpop.permute.xlu0 %789
    %v792 = vsel %vm231, %v786, %v790
    %v793 = vpack.c.bf16 %v792, %v792
    %v795 = vsel %vm342, %v793, 0
    %797 = vmatprep.subr.bf16.mxu0 0
    %798 = vmatpush1.bf16.msra.mxu0 %v334
    %799 = vmatprep.subr.bf16.mxu0 0
    %800 = vmatpush1.bf16.msra.mxu0 %v335
    %801 = vmatprep.subr.bf16.mxu0 0
    %802 = vmatpush1.bf16.msra.mxu0 %v336
    %803 = vmatprep.subr.bf16.mxu0 0
    %804 = vmatpush1.bf16.msra.mxu0 %v337
    %805 = vmatprep.subr.bf16.mxu0 0
    %806 = vmatpush1.bf16.msra.mxu0 0
    %807 = vmatprep.subr.bf16.mxu0 0
    %808 = vmatpush1.bf16.msra.mxu0 0
    %809 = vmatprep.subr.bf16.mxu0 0
    %810 = vmatpush1.bf16.msra.mxu0 0
    %811 = vmatprep.subr.bf16.mxu0 0
    %812 = vmatpush1.bf16.msra.mxu0 0
    %813 = vmatprep.subr.bf16.mxu0 0
    %814 = vmatpush1.bf16.msra.mxu0 0
    %815 = vmatprep.subr.bf16.mxu0 0
    %816 = vmatpush1.bf16.msra.mxu0 0
    %817 = vmatprep.subr.bf16.mxu0 0
    %818 = vmatpush1.bf16.msra.mxu0 0
    %819 = vmatprep.subr.bf16.mxu0 0
    %820 = vmatpush1.bf16.msra.mxu0 0
    %821 = vmatprep.subr.bf16.mxu0 0
    %822 = vmatpush1.bf16.msra.mxu0 0
    %823 = vmatprep.subr.bf16.mxu0 0
    %824 = vmatpush1.bf16.msra.mxu0 0
    %825 = vmatprep.subr.bf16.mxu0 0
    %826 = vmatpush1.bf16.msra.mxu0 0
    %827 = vmatprep.subr.bf16.mxu0 0
    %828 = vmatpush1.bf16.msra.mxu0 0
    %829 = vmatprep.mubr.bf16.mxu0 0
    %830 = vmatmul.mubr.bf16.gmra.mrb[0].mxu0 %v795
    %v831 = vpop.f32.mrb[0].mxu0
    %v832 = vadd.f32 %v317, %v831
    %v833 = vpop.f32.mrb[0].mxu0
    %v834 = vpop.f32.mrb[0].mxu0
    %v835 = vpop.f32.mrb[0].mxu0
    %836 = vdwg.mxu0
    %v837 = vxor.u32 %v832, 2147483648
    %v838 = vmul.f32 %v837, 1.442695
    %v839 = vpow.pop %v838
    %v840 = vadd.f32 %v839, 1.0
    %v841 = vrcp.pop %v840
    %v842 = vmul.f32 1.0, %v841
    %v843 = vtanh.pop %v832
    %v844 = vmul.f32 %v842, %v705
    %846 = vrot.lane.b32.xlu0 %v843, 64
    %v847 = vpop.permute.xlu0 %846
    %v849 = vmul.f32 %v842, %v847
    %851 = vrot.lane.b32.xlu0 %v849, 32
    %v852 = vpop.permute.xlu0 %851
    %v854 = vadd.f32 %v844, %v852
    %v855 = vtanh.pop %v854
    %857 = vrot.lane.b32.xlu0 %v855, 64
    %v858 = vpop.permute.xlu0 %857
    %v860 = vmul.f32 %v842, %v858
    %v861 = vpack.c.bf16 %v783, %v783
    %863 = vrot.lane.b32.xlu0 %v861, 32
    %v864 = vpop.permute.xlu0 %863
    %v866 = vsel %vm231, %v864, 0
    %868 = vmatprep.subr.bf16.mxu0 0
    %869 = vmatpush1.bf16.msra.mxu0 %v227
    %870 = vmatprep.subr.bf16.mxu0 0
    %871 = vmatpush1.bf16.msra.mxu0 %v228
    %872 = vmatprep.subr.bf16.mxu0 0
    %873 = vmatpush1.bf16.msra.mxu0 0
    %874 = vmatprep.subr.bf16.mxu0 0
    %875 = vmatpush1.bf16.msra.mxu0 0
    %876 = vmatprep.subr.bf16.mxu0 0
    %877 = vmatpush1.bf16.msra.mxu0 0
    %878 = vmatprep.subr.bf16.mxu0 0
    %879 = vmatpush1.bf16.msra.mxu0 0
    %880 = vmatprep.subr.bf16.mxu0 0
    %881 = vmatpush1.bf16.msra.mxu0 0
    %882 = vmatprep.subr.bf16.mxu0 0
    %883 = vmatpush1.bf16.msra.mxu0 0
    %884 = vmatprep.subr.bf16.mxu0 0
    %885 = vmatpush1.bf16.msra.mxu0 0
    %886 = vmatprep.subr.bf16.mxu0 0
    %887 = vmatpush1.bf16.msra.mxu0 0
    %888 = vmatprep.subr.bf16.mxu0 0
    %889 = vmatpush1.bf16.msra.mxu0 0
    %890 = vmatprep.subr.bf16.mxu0 0
    %891 = vmatpush1.bf16.msra.mxu0 0
    %892 = vmatprep.subr.bf16.mxu0 0
    %893 = vmatpush1.bf16.msra.mxu0 0
    %894 = vmatprep.subr.bf16.mxu0 0
    %895 = vmatpush1.bf16.msra.mxu0 0
    %896 = vmatprep.subr.bf16.mxu0 0
    %897 = vmatpush1.bf16.msra.mxu0 0
    %898 = vmatprep.subr.bf16.mxu0 0
    %899 = vmatpush1.bf16.msra.mxu0 0
    %900 = vmatprep.mubr.bf16.mxu0 0
    %901 = vmatmul.mubr.bf16.gmra.mrb[0].mxu0 %v866
    %v902 = vpop.f32.mrb[0].mxu0
    %v903 = vadd.f32 0.0, %v902
    %v904 = vpop.f32.mrb[0].mxu0
    %v905 = vpop.f32.mrb[0].mxu0
    %v906 = vpop.f32.mrb[0].mxu0
    %907 = vdwg.mxu0
    %v908 = vadd.f32 %v200, %v903
    %v909 = vxor.u32 %v908, 2147483648
    %v910 = vmul.f32 %v909, 1.442695
    %v911 = vpow.pop %v910
    %v912 = vadd.f32 %v911, 1.0
    %v913 = vrcp.pop %v912
    %v914 = vmul.f32 1.0, %v913
    %v915 = vtanh.pop %v908
    %v916 = vmul.f32 %v914, %v777
    %918 = vrot.lane.b32.xlu0 %v915, 64
    %v919 = vpop.permute.xlu0 %918
    %v921 = vmul.f32 %v914, %v919
    %923 = vrot.lane.b32.xlu0 %v921, 32
    %v924 = vpop.permute.xlu0 %923
    %v926 = vadd.f32 %v916, %v924
    %v927 = vtanh.pop %v926
    %929 = vrot.lane.b32.xlu0 %v927, 64
    %v930 = vpop.permute.xlu0 %929
    %v932 = vmul.f32 %v914, %v930
    %934 = vrot.lane.b32.xlu0 %v932, 32
    %v935 = vpop.permute.xlu0 %934
    %938 = vrot.lane.b32.xlu0 %v860, 64
    %v939 = vpop.permute.xlu0 %938
    %v941 = vsel %vm231, %v935, %v939
    %v942 = vpack.c.bf16 %v941, %v941
    %v944 = vsel %vm342, %v942, 0
    %946 = vmatprep.subr.bf16.mxu0 0
    %947 = vmatpush1.bf16.msra.mxu0 %v334
    %948 = vmatprep.subr.bf16.mxu0 0
    %949 = vmatpush1.bf16.msra.mxu0 %v335
    %950 = vmatprep.subr.bf16.mxu0 0
    %951 = vmatpush1.bf16.msra.mxu0 %v336
    %952 = vmatprep.subr.bf16.mxu0 0
    %953 = vmatpush1.bf16.msra.mxu0 %v337
    %954 = vmatprep.subr.bf16.mxu0 0
    %955 = vmatpush1.bf16.msra.mxu0 0
    %956 = vmatprep.subr.bf16.mxu0 0
    %957 = vmatpush1.bf16.msra.mxu0 0
    %958 = vmatprep.subr.bf16.mxu0 0
    %959 = vmatpush1.bf16.msra.mxu0 0
    %960 = vmatprep.subr.bf16.mxu0 0
    %961 = vmatpush1.bf16.msra.mxu0 0
    %962 = vmatprep.subr.bf16.mxu0 0
    %963 = vmatpush1.bf16.msra.mxu0 0
    %964 = vmatprep.subr.bf16.mxu0 0
    %965 = vmatpush1.bf16.msra.mxu0 0
    %966 = vmatprep.subr.bf16.mxu0 0
    %967 = vmatpush1.bf16.msra.mxu0 0
    %968 = vmatprep.subr.bf16.mxu0 0
    %969 = vmatpush1.bf16.msra.mxu0 0
    %970 = vmatprep.subr.bf16.mxu0 0
    %971 = vmatpush1.bf16.msra.mxu0 0
    %972 = vmatprep.subr.bf16.mxu0 0
    %973 = vmatpush1.bf16.msra.mxu0 0
    %974 = vmatprep.subr.bf16.mxu0 0
    %975 = vmatpush1.bf16.msra.mxu0 0
    %976 = vmatprep.subr.bf16.mxu0 0
    %977 = vmatpush1.bf16.msra.mxu0 0
    %978 = vmatprep.mubr.bf16.mxu0 0
    %979 = vmatmul.mubr.bf16.gmra.mrb[0].mxu0 %v944
    %v980 = vpop.f32.mrb[0].mxu0
    %v981 = vadd.f32 %v317, %v980
    %v982 = vpop.f32.mrb[0].mxu0
    %v983 = vpop.f32.mrb[0].mxu0
    %v984 = vpop.f32.mrb[0].mxu0
    %985 = vdwg.mxu0
    %v986 = vxor.u32 %v981, 2147483648
    %v987 = vmul.f32 %v986, 1.442695
    %v988 = vpow.pop %v987
    %v989 = vadd.f32 %v988, 1.0
    %v990 = vrcp.pop %v989
    %v991 = vmul.f32 1.0, %v990
    %v992 = vtanh.pop %v981
    %v993 = vmul.f32 %v991, %v854
    %995 = vrot.lane.b32.xlu0 %v992, 64
    %v996 = vpop.permute.xlu0 %995
    %v998 = vmul.f32 %v991, %v996
    %1000 = vrot.lane.b32.xlu0 %v998, 32
    %v1001 = vpop.permute.xlu0 %1000
    %v1003 = vadd.f32 %v993, %v1001
    %v1004 = vtanh.pop %v1003
    %1006 = vrot.lane.b32.xlu0 %v1004, 64
    %v1007 = vpop.permute.xlu0 %1006
    %v1009 = vmul.f32 %v991, %v1007
    %v1010 = vpack.c.bf16 %v932, %v932
    %1012 = vrot.lane.b32.xlu0 %v1010, 32
    %v1013 = vpop.permute.xlu0 %1012
    %v1015 = vsel %vm231, %v1013, 0
    %1017 = vmatprep.subr.bf16.mxu0 0
    %1018 = vmatpush1.bf16.msra.mxu0 %v227
    %1019 = vmatprep.subr.bf16.mxu0 0
    %1020 = vmatpush1.bf16.msra.mxu0 %v228
    %1021 = vmatprep.subr.bf16.mxu0 0
    %1022 = vmatpush1.bf16.msra.mxu0 0
    %1023 = vmatprep.subr.bf16.mxu0 0
    %1024 = vmatpush1.bf16.msra.mxu0 0
    %1025 = vmatprep.subr.bf16.mxu0 0
    %1026 = vmatpush1.bf16.msra.mxu0 0
    %1027 = vmatprep.subr.bf16.mxu0 0
    %1028 = vmatpush1.bf16.msra.mxu0 0
    %1029 = vmatprep.subr.bf16.mxu0 0
    %1030 = vmatpush1.bf16.msra.mxu0 0
    %1031 = vmatprep.subr.bf16.mxu0 0
    %1032 = vmatpush1.bf16.msra.mxu0 0
    %1033 = vmatprep.subr.bf16.mxu0 0
    %1034 = vmatpush1.bf16.msra.mxu0 0
    %1035 = vmatprep.subr.bf16.mxu0 0
    %1036 = vmatpush1.bf16.msra.mxu0 0
    %1037 = vmatprep.subr.bf16.mxu0 0
    %1038 = vmatpush1.bf16.msra.mxu0 0
    %1039 = vmatprep.subr.bf16.mxu0 0
    %1040 = vmatpush1.bf16.msra.mxu0 0
    %1041 = vmatprep.subr.bf16.mxu0 0
    %1042 = vmatpush1.bf16.msra.mxu0 0
    %1043 = vmatprep.subr.bf16.mxu0 0
    %1044 = vmatpush1.bf16.msra.mxu0 0
    %1045 = vmatprep.subr.bf16.mxu0 0
    %1046 = vmatpush1.bf16.msra.mxu0 0
    %1047 = vmatprep.subr.bf16.mxu0 0
    %1048 = vmatpush1.bf16.msra.mxu0 0
    %1049 = vmatprep.mubr.bf16.mxu0 0
    %1050 = vmatmul.mubr.bf16.gmra.mrb[0].mxu0 %v1015
    %v1051 = vpop.f32.mrb[0].mxu0
    %v1052 = vadd.f32 0.0, %v1051
    %v1053 = vpop.f32.mrb[0].mxu0
    %v1054 = vpop.f32.mrb[0].mxu0
    %v1055 = vpop.f32.mrb[0].mxu0
    %1056 = vdwg.mxu0
    %v1057 = vadd.f32 %v210, %v1052
    %v1058 = vxor.u32 %v1057, 2147483648
    %v1059 = vmul.f32 %v1058, 1.442695
    %v1060 = vpow.pop %v1059
    %v1061 = vadd.f32 %v1060, 1.0
    %v1062 = vrcp.pop %v1061
    %v1063 = vmul.f32 1.0, %v1062
    %v1064 = vtanh.pop %v1057
    %v1065 = vmul.f32 %v1063, %v926
    %1067 = vrot.lane.b32.xlu0 %v1064, 64
    %v1068 = vpop.permute.xlu0 %1067
    %v1070 = vmul.f32 %v1063, %v1068
    %1072 = vrot.lane.b32.xlu0 %v1070, 32
    %v1073 = vpop.permute.xlu0 %1072
    %v1075 = vadd.f32 %v1065, %v1073
    %v1076 = vtanh.pop %v1075
    %1078 = vrot.lane.b32.xlu0 %v1076, 64
    %v1079 = vpop.permute.xlu0 %1078
    %v1081 = vmul.f32 %v1063, %v1079
    %1083 = vrot.lane.b32.xlu0 %v1081, 32
    %v1084 = vpop.permute.xlu0 %1083
    %1087 = vrot.lane.b32.xlu0 %v1009, 64
    %v1088 = vpop.permute.xlu0 %1087
    %v1090 = vsel %vm231, %v1084, %v1088
    %v1091 = vpack.c.bf16 %v1090, %v1090
    %v1093 = vsel %vm342, %v1091, 0
    %1095 = vmatprep.subr.bf16.mxu0 0
    %1096 = vmatpush1.bf16.msra.mxu0 %v334
    %1097 = vmatprep.subr.bf16.mxu0 0
    %1098 = vmatpush1.bf16.msra.mxu0 %v335
    %1099 = vmatprep.subr.bf16.mxu0 0
    %1100 = vmatpush1.bf16.msra.mxu0 %v336
    %1101 = vmatprep.subr.bf16.mxu0 0
    %1102 = vmatpush1.bf16.msra.mxu0 %v337
    %1103 = vmatprep.subr.bf16.mxu0 0
    %1104 = vmatpush1.bf16.msra.mxu0 0
    %1105 = vmatprep.subr.bf16.mxu0 0
    %1106 = vmatpush1.bf16.msra.mxu0 0
    %1107 = vmatprep.subr.bf16.mxu0 0
    %1108 = vmatpush1.bf16.msra.mxu0 0
    %1109 = vmatprep.subr.bf16.mxu0 0
    %1110 = vmatpush1.bf16.msra.mxu0 0
    %1111 = vmatprep.subr.bf16.mxu0 0
    %1112 = vmatpush1.bf16.msra.mxu0 0
    %1113 = vmatprep.subr.bf16.mxu0 0
    %1114 = vmatpush1.bf16.msra.mxu0 0
    %1115 = vmatprep.subr.bf16.mxu0 0
    %1116 = vmatpush1.bf16.msra.mxu0 0
    %1117 = vmatprep.subr.bf16.mxu0 0
    %1118 = vmatpush1.bf16.msra.mxu0 0
    %1119 = vmatprep.subr.bf16.mxu0 0
    %1120 = vmatpush1.bf16.msra.mxu0 0
    %1121 = vmatprep.subr.bf16.mxu0 0
    %1122 = vmatpush1.bf16.msra.mxu0 0
    %1123 = vmatprep.subr.bf16.mxu0 0
    %1124 = vmatpush1.bf16.msra.mxu0 0
    %1125 = vmatprep.subr.bf16.mxu0 0
    %1126 = vmatpush1.bf16.msra.mxu0 0
    %1127 = vmatprep.mubr.bf16.mxu0 0
    %1128 = vmatmul.mubr.bf16.gmra.mrb[0].mxu0 %v1093
    %v1129 = vpop.f32.mrb[0].mxu0
    %v1130 = vadd.f32 %v317, %v1129
    %v1131 = vpop.f32.mrb[0].mxu0
    %v1132 = vpop.f32.mrb[0].mxu0
    %v1133 = vpop.f32.mrb[0].mxu0
    %1134 = vdwg.mxu0
    %v1135 = vxor.u32 %v1130, 2147483648
    %v1136 = vmul.f32 %v1135, 1.442695
    %v1137 = vpow.pop %v1136
    %v1138 = vadd.f32 %v1137, 1.0
    %v1139 = vrcp.pop %v1138
    %v1140 = vmul.f32 1.0, %v1139
    %v1141 = vtanh.pop %v1130
    %v1142 = vmul.f32 %v1140, %v1003
    %1144 = vrot.lane.b32.xlu0 %v1141, 64
    %v1145 = vpop.permute.xlu0 %1144
    %v1147 = vmul.f32 %v1140, %v1145
    %1149 = vrot.lane.b32.xlu0 %v1147, 32
    %v1150 = vpop.permute.xlu0 %1149
    %v1152 = vadd.f32 %v1142, %v1150
    %v1153 = vtanh.pop %v1152
    %1155 = vrot.lane.b32.xlu0 %v1153, 64
    %v1156 = vpop.permute.xlu0 %1155
    %v1158 = vmul.f32 %v1140, %v1156
    %v1159 = vpack.c.bf16 %v1081, %v1081
    %1161 = vrot.lane.b32.xlu0 %v1159, 32
    %v1162 = vpop.permute.xlu0 %1161
    %v1164 = vsel %vm231, %v1162, 0
    %1166 = vmatprep.subr.bf16.mxu0 0
    %1167 = vmatpush1.bf16.msra.mxu0 %v227
    %1168 = vmatprep.subr.bf16.mxu0 0
    %1169 = vmatpush1.bf16.msra.mxu0 %v228
    %1170 = vmatprep.subr.bf16.mxu0 0
    %1171 = vmatpush1.bf16.msra.mxu0 0
    %1172 = vmatprep.subr.bf16.mxu0 0
    %1173 = vmatpush1.bf16.msra.mxu0 0
    %1174 = vmatprep.subr.bf16.mxu0 0
    %1175 = vmatpush1.bf16.msra.mxu0 0
    %1176 = vmatprep.subr.bf16.mxu0 0
    %1177 = vmatpush1.bf16.msra.mxu0 0
    %1178 = vmatprep.subr.bf16.mxu0 0
    %1179 = vmatpush1.bf16.msra.mxu0 0
    %1180 = vmatprep.subr.bf16.mxu0 0
    %1181 = vmatpush1.bf16.msra.mxu0 0
    %1182 = vmatprep.subr.bf16.mxu0 0
    %1183 = vmatpush1.bf16.msra.mxu0 0
    %1184 = vmatprep.subr.bf16.mxu0 0
    %1185 = vmatpush1.bf16.msra.mxu0 0
    %1186 = vmatprep.subr.bf16.mxu0 0
    %1187 = vmatpush1.bf16.msra.mxu0 0
    %1188 = vmatprep.subr.bf16.mxu0 0
    %1189 = vmatpush1.bf16.msra.mxu0 0
    %1190 = vmatprep.subr.bf16.mxu0 0
    %1191 = vmatpush1.bf16.msra.mxu0 0
    %1192 = vmatprep.subr.bf16.mxu0 0
    %1193 = vmatpush1.bf16.msra.mxu0 0
    %1194 = vmatprep.subr.bf16.mxu0 0
    %1195 = vmatpush1.bf16.msra.mxu0 0
    %1196 = vmatprep.subr.bf16.mxu0 0
    %1197 = vmatpush1.bf16.msra.mxu0 0
    %1198 = vmatprep.mubr.bf16.mxu0 0
    %1199 = vmatmul.mubr.bf16.gmra.mrb[0].mxu0 %v1164
    %v1200 = vpop.f32.mrb[0].mxu0
    %v1201 = vadd.f32 0.0, %v1200
    %v1202 = vpop.f32.mrb[0].mxu0
    %v1203 = vpop.f32.mrb[0].mxu0
    %v1204 = vpop.f32.mrb[0].mxu0
    %1205 = vdwg.mxu0
    %v1206 = vadd.f32 %v207, %v1201
    %v1207 = vxor.u32 %v1206, 2147483648
    %v1208 = vmul.f32 %v1207, 1.442695
    %v1209 = vpow.pop %v1208
    %v1210 = vadd.f32 %v1209, 1.0
    %v1211 = vrcp.pop %v1210
    %v1212 = vmul.f32 1.0, %v1211
    %v1213 = vtanh.pop %v1206
    %v1214 = vmul.f32 %v1212, %v1075
    %1216 = vrot.lane.b32.xlu0 %v1213, 64
    %v1217 = vpop.permute.xlu0 %1216
    %v1219 = vmul.f32 %v1212, %v1217
    %1221 = vrot.lane.b32.xlu0 %v1219, 32
    %v1222 = vpop.permute.xlu0 %1221
    %v1224 = vadd.f32 %v1214, %v1222
    %v1225 = vtanh.pop %v1224
    %1227 = vrot.lane.b32.xlu0 %v1225, 64
    %v1228 = vpop.permute.xlu0 %1227
    %v1230 = vmul.f32 %v1212, %v1228
    %1232 = vrot.lane.b32.xlu0 %v1230, 32
    %v1233 = vpop.permute.xlu0 %1232
    %1236 = vrot.lane.b32.xlu0 %v1158, 64
    %v1237 = vpop.permute.xlu0 %1236
    %v1239 = vsel %vm231, %v1233, %v1237
    %v1240 = vpack.c.bf16 %v1239, %v1239
    %v1242 = vsel %vm342, %v1240, 0
    %1244 = vmatprep.subr.bf16.mxu0 0
    %1245 = vmatpush1.bf16.msra.mxu0 %v334
    %1246 = vmatprep.subr.bf16.mxu0 0
    %1247 = vmatpush1.bf16.msra.mxu0 %v335
    %1248 = vmatprep.subr.bf16.mxu0 0
    %1249 = vmatpush1.bf16.msra.mxu0 %v336
    %1250 = vmatprep.subr.bf16.mxu0 0
    %1251 = vmatpush1.bf16.msra.mxu0 %v337
    %1252 = vmatprep.subr.bf16.mxu0 0
    %1253 = vmatpush1.bf16.msra.mxu0 0
    %1254 = vmatprep.subr.bf16.mxu0 0
    %1255 = vmatpush1.bf16.msra.mxu0 0
    %1256 = vmatprep.subr.bf16.mxu0 0
    %1257 = vmatpush1.bf16.msra.mxu0 0
    %1258 = vmatprep.subr.bf16.mxu0 0
    %1259 = vmatpush1.bf16.msra.mxu0 0
    %1260 = vmatprep.subr.bf16.mxu0 0
    %1261 = vmatpush1.bf16.msra.mxu0 0
    %1262 = vmatprep.subr.bf16.mxu0 0
    %1263 = vmatpush1.bf16.msra.mxu0 0
    %1264 = vmatprep.subr.bf16.mxu0 0
    %1265 = vmatpush1.bf16.msra.mxu0 0
    %1266 = vmatprep.subr.bf16.mxu0 0
    %1267 = vmatpush1.bf16.msra.mxu0 0
    %1268 = vmatprep.subr.bf16.mxu0 0
    %1269 = vmatpush1.bf16.msra.mxu0 0
    %1270 = vmatprep.subr.bf16.mxu0 0
    %1271 = vmatpush1.bf16.msra.mxu0 0
    %1272 = vmatprep.subr.bf16.mxu0 0
    %1273 = vmatpush1.bf16.msra.mxu0 0
    %1274 = vmatprep.subr.bf16.mxu0 0
    %1275 = vmatpush1.bf16.msra.mxu0 0
    %1276 = vmatprep.mubr.bf16.mxu0 0
    %1277 = vmatmul.mubr.bf16.gmra.mrb[0].mxu0 %v1242
    %v1278 = vpop.f32.mrb[0].mxu0
    %v1279 = vadd.f32 %v317, %v1278
    %v1280 = vpop.f32.mrb[0].mxu0
    %v1281 = vpop.f32.mrb[0].mxu0
    %v1282 = vpop.f32.mrb[0].mxu0
    %1283 = vdwg.mxu0
    %v1284 = vxor.u32 %v1279, 2147483648
    %v1285 = vmul.f32 %v1284, 1.442695
    %v1286 = vpow.pop %v1285
    %v1287 = vadd.f32 %v1286, 1.0
    %v1288 = vrcp.pop %v1287
    %v1289 = vmul.f32 1.0, %v1288
    %v1290 = vtanh.pop %v1279
    %v1291 = vmul.f32 %v1289, %v1152
    %1293 = vrot.lane.b32.xlu0 %v1290, 64
    %v1294 = vpop.permute.xlu0 %1293
    %v1296 = vmul.f32 %v1289, %v1294
    %1298 = vrot.lane.b32.xlu0 %v1296, 32
    %v1299 = vpop.permute.xlu0 %1298
    %v1301 = vadd.f32 %v1291, %v1299
    %v1302 = vtanh.pop %v1301
    %1304 = vrot.lane.b32.xlu0 %v1302, 64
    %v1305 = vpop.permute.xlu0 %1304
    %v1307 = vmul.f32 %v1289, %v1305
    %v1308 = vpack.c.bf16 %v1230, %v1230
    %1310 = vrot.lane.b32.xlu0 %v1308, 32
    %v1311 = vpop.permute.xlu0 %1310
    %v1313 = vsel %vm231, %v1311, 0
    %1315 = vmatprep.subr.bf16.mxu0 0
    %1316 = vmatpush1.bf16.msra.mxu0 %v227
    %1317 = vmatprep.subr.bf16.mxu0 0
    %1318 = vmatpush1.bf16.msra.mxu0 %v228
    %1319 = vmatprep.subr.bf16.mxu0 0
    %1320 = vmatpush1.bf16.msra.mxu0 0
    %1321 = vmatprep.subr.bf16.mxu0 0
    %1322 = vmatpush1.bf16.msra.mxu0 0
    %1323 = vmatprep.subr.bf16.mxu0 0
    %1324 = vmatpush1.bf16.msra.mxu0 0
    %1325 = vmatprep.subr.bf16.mxu0 0
    %1326 = vmatpush1.bf16.msra.mxu0 0
    %1327 = vmatprep.subr.bf16.mxu0 0
    %1328 = vmatpush1.bf16.msra.mxu0 0
    %1329 = vmatprep.subr.bf16.mxu0 0
    %1330 = vmatpush1.bf16.msra.mxu0 0
    %1331 = vmatprep.subr.bf16.mxu0 0
    %1332 = vmatpush1.bf16.msra.mxu0 0
    %1333 = vmatprep.subr.bf16.mxu0 0
    %1334 = vmatpush1.bf16.msra.mxu0 0
    %1335 = vmatprep.subr.bf16.mxu0 0
    %1336 = vmatpush1.bf16.msra.mxu0 0
    %1337 = vmatprep.subr.bf16.mxu0 0
    %1338 = vmatpush1.bf16.msra.mxu0 0
    %1339 = vmatprep.subr.bf16.mxu0 0
    %1340 = vmatpush1.bf16.msra.mxu0 0
    %1341 = vmatprep.subr.bf16.mxu0 0
    %1342 = vmatpush1.bf16.msra.mxu0 0
    %1343 = vmatprep.subr.bf16.mxu0 0
    %1344 = vmatpush1.bf16.msra.mxu0 0
    %1345 = vmatprep.subr.bf16.mxu0 0
    %1346 = vmatpush1.bf16.msra.mxu0 0
    %1347 = vmatprep.mubr.bf16.mxu0 0
    %1348 = vmatmul.mubr.bf16.gmra.mrb[0].mxu0 %v1313
    %v1349 = vpop.f32.mrb[0].mxu0
    %v1350 = vadd.f32 0.0, %v1349
    %v1351 = vpop.f32.mrb[0].mxu0
    %v1352 = vpop.f32.mrb[0].mxu0
    %v1353 = vpop.f32.mrb[0].mxu0
    %1354 = vdwg.mxu0
    %v1355 = vadd.f32 %v211, %v1350
    %v1356 = vxor.u32 %v1355, 2147483648
    %v1357 = vmul.f32 %v1356, 1.442695
    %v1358 = vpow.pop %v1357
    %v1359 = vadd.f32 %v1358, 1.0
    %v1360 = vrcp.pop %v1359
    %v1361 = vmul.f32 1.0, %v1360
    %v1362 = vtanh.pop %v1355
    %v1363 = vmul.f32 %v1361, %v1224
    %1365 = vrot.lane.b32.xlu0 %v1362, 64
    %v1366 = vpop.permute.xlu0 %1365
    %v1368 = vmul.f32 %v1361, %v1366
    %1370 = vrot.lane.b32.xlu0 %v1368, 32
    %v1371 = vpop.permute.xlu0 %1370
    %v1373 = vadd.f32 %v1363, %v1371
    %v1374 = vtanh.pop %v1373
    %1376 = vrot.lane.b32.xlu0 %v1374, 64
    %v1377 = vpop.permute.xlu0 %1376
    %v1379 = vmul.f32 %v1361, %v1377
    %1381 = vrot.lane.b32.xlu0 %v1379, 32
    %v1382 = vpop.permute.xlu0 %1381
    %1385 = vrot.lane.b32.xlu0 %v1307, 64
    %v1386 = vpop.permute.xlu0 %1385
    %v1388 = vsel %vm231, %v1382, %v1386
    %v1389 = vpack.c.bf16 %v1388, %v1388
    %v1391 = vsel %vm342, %v1389, 0
    %1393 = vmatprep.subr.bf16.mxu0 0
    %1394 = vmatpush1.bf16.msra.mxu0 %v334
    %1395 = vmatprep.subr.bf16.mxu0 0
    %1396 = vmatpush1.bf16.msra.mxu0 %v335
    %1397 = vmatprep.subr.bf16.mxu0 0
    %1398 = vmatpush1.bf16.msra.mxu0 %v336
    %1399 = vmatprep.subr.bf16.mxu0 0
    %1400 = vmatpush1.bf16.msra.mxu0 %v337
    %1401 = vmatprep.subr.bf16.mxu0 0
    %1402 = vmatpush1.bf16.msra.mxu0 0
    %1403 = vmatprep.subr.bf16.mxu0 0
    %1404 = vmatpush1.bf16.msra.mxu0 0
    %1405 = vmatprep.subr.bf16.mxu0 0
    %1406 = vmatpush1.bf16.msra.mxu0 0
    %1407 = vmatprep.subr.bf16.mxu0 0
    %1408 = vmatpush1.bf16.msra.mxu0 0
    %1409 = vmatprep.subr.bf16.mxu0 0
    %1410 = vmatpush1.bf16.msra.mxu0 0
    %1411 = vmatprep.subr.bf16.mxu0 0
    %1412 = vmatpush1.bf16.msra.mxu0 0
    %1413 = vmatprep.subr.bf16.mxu0 0
    %1414 = vmatpush1.bf16.msra.mxu0 0
    %1415 = vmatprep.subr.bf16.mxu0 0
    %1416 = vmatpush1.bf16.msra.mxu0 0
    %1417 = vmatprep.subr.bf16.mxu0 0
    %1418 = vmatpush1.bf16.msra.mxu0 0
    %1419 = vmatprep.subr.bf16.mxu0 0
    %1420 = vmatpush1.bf16.msra.mxu0 0
    %1421 = vmatprep.subr.bf16.mxu0 0
    %1422 = vmatpush1.bf16.msra.mxu0 0
    %1423 = vmatprep.subr.bf16.mxu0 0
    %1424 = vmatpush1.bf16.msra.mxu0 0
    %1425 = vmatprep.mubr.bf16.mxu0 0
    %1426 = vmatmul.mubr.bf16.gmra.mrb[0].mxu0 %v1391
    %v1427 = vpop.f32.mrb[0].mxu0
    %v1428 = vadd.f32 %v317, %v1427
    %v1429 = vpop.f32.mrb[0].mxu0
    %v1430 = vpop.f32.mrb[0].mxu0
    %v1431 = vpop.f32.mrb[0].mxu0
    %1432 = vdwg.mxu0
    %v1433 = vxor.u32 %v1428, 2147483648
    %v1434 = vmul.f32 %v1433, 1.442695
    %v1435 = vpow.pop %v1434
    %v1436 = vadd.f32 %v1435, 1.0
    %v1437 = vrcp.pop %v1436
    %v1438 = vmul.f32 1.0, %v1437
    %v1439 = vtanh.pop %v1428
    %v1440 = vmul.f32 %v1438, %v1301
    %1442 = vrot.lane.b32.xlu0 %v1439, 64
    %v1443 = vpop.permute.xlu0 %1442
    %v1445 = vmul.f32 %v1438, %v1443
    %1447 = vrot.lane.b32.xlu0 %v1445, 32
    %v1448 = vpop.permute.xlu0 %1447
    %v1450 = vadd.f32 %v1440, %v1448
    %v1451 = vtanh.pop %v1450
    %1453 = vrot.lane.b32.xlu0 %v1451, 64
    %v1454 = vpop.permute.xlu0 %1453
    %v1456 = vmul.f32 %v1438, %v1454
    %vm1457 = vcmask 254976
    %1458 = vst.msk [vmem:[#allocation9] sm:$0x3] %vm1457, %v1382
    %1460 = vrot.lane.b32.xlu0 %v1373, 96
    %v1461 = vpop.permute.xlu0 %1460
    %1463 = vst.msk [vmem:[#allocation11] sm:$0x3] %vm1457, %v1461
    %1465 = vrot.lane.b32.xlu0 %v1456, 32
    %v1466 = vpop.permute.xlu0 %1465
    %s1468 = scalar_lea.vmem [#allocation9], 2
    %1469 = vst.msk [vmem:[%s1468] sm:$0x3] %vm1457, %v1466
    %1471 = vrot.lane.b32.xlu0 %v1450, 96
    %v1472 = vpop.permute.xlu0 %1471
    %s1474 = scalar_lea.vmem [#allocation11], 2
    %1475 = vst.msk [vmem:[%s1474] sm:$0x3] %vm1457, %v1472
    %1476 = vrot.lane.b32.xlu0 %v413, 32
    %v1477 = vpop.permute.xlu0 %1476
    %1478 = vrot.lane.b32.xlu0 %v562, 32
    %v1479 = vpop.permute.xlu0 %1478
    %1480 = vrot.lane.b32.xlu0 %v711, 32
    %v1481 = vpop.permute.xlu0 %1480
    %1482 = vrot.lane.b32.xlu0 %v860, 32
    %v1483 = vpop.permute.xlu0 %1482
    %1484 = vrot.lane.b32.xlu0 %v1009, 32
    %v1485 = vpop.permute.xlu0 %1484
    %1486 = vrot.lane.b32.xlu0 %v1158, 32
    %v1487 = vpop.permute.xlu0 %1486
    %1488 = vrot.lane.b32.xlu0 %v1307, 32
    %v1489 = vpop.permute.xlu0 %1488
    %v1497 = vcombine.low %v1477, %v1481
    %v1499 = vunpack.c.l.s4 1983009808
    %v1500 = vunpack.c.0.s8 %v1499
    %v1501 = vlaneseq
    %v1502 = vshrl.u32 %v1501, 7
    %v1503 = vsub.s32 %v1500, %v1502
    %v1504 = vrot.slane %v1497, %v1503
    %v1505 = vcombine.low %v1479, %v1483
    %v1507 = vunpack.c.l.s4 1983009808
    %v1508 = vunpack.c.0.s8 %v1507
    %v1509 = vlaneseq
    %v1510 = vshrl.u32 %v1509, 7
    %v1511 = vsub.s32 %v1508, %v1510
    %v1512 = vrot.slane %v1505, %v1511
    %v1513 = vcombine.low %v1485, %v1489
    %v1515 = vunpack.c.l.s4 1983009808
    %v1516 = vunpack.c.0.s8 %v1515
    %v1517 = vlaneseq
    %v1518 = vshrl.u32 %v1517, 7
    %v1519 = vsub.s32 %v1516, %v1518
    %v1520 = vrot.slane %v1513, %v1519
    %v1521 = vcombine.low %v1487, %v1466
    %v1523 = vunpack.c.l.s4 1983009808
    %v1524 = vunpack.c.0.s8 %v1523
    %v1525 = vlaneseq
    %v1526 = vshrl.u32 %v1525, 7
    %v1527 = vsub.s32 %v1524, %v1526
    %v1528 = vrot.slane %v1521, %v1527
    %v1529 = vcombine.low %v1504, %v1512
    %v1531 = vunpack.c.l.s4 1934713408
    %v1532 = vunpack.c.0.s8 %v1531
    %v1533 = vlaneseq
    %v1534 = vshrl.u32 %v1533, 7
    %v1535 = vsub.s32 %v1532, %v1534
    %v1536 = vrot.slane %v1529, %v1535
    %v1537 = vcombine.low %v1520, %v1528
    %v1539 = vunpack.c.l.s4 1934713408
    %v1540 = vunpack.c.0.s8 %v1539
    %v1541 = vlaneseq
    %v1542 = vshrl.u32 %v1541, 7
    %v1543 = vsub.s32 %v1540, %v1542
    %v1544 = vrot.slane %v1537, %v1543
    %v1545 = vcombine.low %v1536, %v1544
    %v1546 = vcombine.high %v1536, %v1544
    %v1547 = vpack.c.bf16 %v1546, %v1545
    %v1548 = vlaneseq
    %v1549 = vshrl.u32 %v1548, 7
    %v1550 = vsub.s32 0, %v1549
    %v1551 = vrot.slane %v87, %v1550
    %v1556 = vunpack.c.l.b16 %v82
    %v1557 = vunpack.c.l.b16 %v83
    %v1558 = vunpack.c.l.b16 %v84
    %v1559 = vunpack.c.l.b16 %v85
    %v1560 = vpack.c.b16 %v1557, %v1556
    %v1561 = vpack.c.b16 %v1559, %v1558
    %v1565 = vsel %vm231, %v1547, 0
    %1567 = vmatprep.subr.bf16.mxu0 0
    %1568 = vmatpush1.bf16.msra.mxu0 %v1560
    %1569 = vmatprep.subr.bf16.mxu0 0
    %1570 = vmatpush1.bf16.msra.mxu0 %v1561
    %1571 = vmatprep.subr.bf16.mxu0 0
    %1572 = vmatpush1.bf16.msra.mxu0 0
    %1573 = vmatprep.subr.bf16.mxu0 0
    %1574 = vmatpush1.bf16.msra.mxu0 0
    %1575 = vmatprep.subr.bf16.mxu0 0
    %1576 = vmatpush1.bf16.msra.mxu0 0
    %1577 = vmatprep.subr.bf16.mxu0 0
    %1578 = vmatpush1.bf16.msra.mxu0 0
    %1579 = vmatprep.subr.bf16.mxu0 0
    %1580 = vmatpush1.bf16.msra.mxu0 0
    %1581 = vmatprep.subr.bf16.mxu0 0
    %1582 = vmatpush1.bf16.msra.mxu0 0
    %1583 = vmatprep.subr.bf16.mxu0 0
    %1584 = vmatpush1.bf16.msra.mxu0 0
    %1585 = vmatprep.subr.bf16.mxu0 0
    %1586 = vmatpush1.bf16.msra.mxu0 0
    %1587 = vmatprep.subr.bf16.mxu0 0
    %1588 = vmatpush1.bf16.msra.mxu0 0
    %1589 = vmatprep.subr.bf16.mxu0 0
    %1590 = vmatpush1.bf16.msra.mxu0 0
    %1591 = vmatprep.subr.bf16.mxu0 0
    %1592 = vmatpush1.bf16.msra.mxu0 0
    %1593 = vmatprep.subr.bf16.mxu0 0
    %1594 = vmatpush1.bf16.msra.mxu0 0
    %1595 = vmatprep.subr.bf16.mxu0 0
    %1596 = vmatpush1.bf16.msra.mxu0 0
    %1597 = vmatprep.subr.bf16.mxu0 0
    %1598 = vmatpush1.bf16.msra.mxu0 0
    %1599 = vmatprep.mubr.bf16.mxu0 0
    %1600 = vmatmul.mubr.bf16.gmra.mrb[0].mxu0 %v1565
    %v1601 = vpop.f32.mrb[0].mxu0
    %v1602 = vadd.f32 %v1551, %v1601
    %v1603 = vpop.f32.mrb[0].mxu0
    %v1604 = vpop.f32.mrb[0].mxu0
    %v1605 = vadd.f32 %v1551, %v1604
    %v1606 = vpop.f32.mrb[0].mxu0
    %1607 = vdwg.mxu0
    %vm1608 = vcmask 64512
    %1609 = vst.msk [vmem:[#allocation8] sm:$0xff] %vm1608, %v1602
    %1610 = vst.msk [vmem:[#allocation8 + $0x8] sm:$0xff] %vm1608, %v1605
    // Predicated region
    $region30: #{forward.1} parent=1 // pred_check
      _
    $region31: #{forward.1} parent=1 // pred_check_branch
      %1612 = sbr.rel (0) target = $region33
    $region32: #{forward.1} parent=1 // pred_region
      %s1614 = ssub.s32 256, 256
      %1615 = vsyncadd [#allocation4], %s1614
      %s1616 = sshll.u32 [#allocation8], 4
      %s1617 = int_to_ptr.vmem [resolvable:$true] %s1616
      %1622 = dma.vmem_to_hbm [thread:$0]  %s1617, 256, %s4, [#allocation4], 128, 128, 8
    $region33: #{forward.1} parent=1 // pred_fallthru
      _
    // Predicated region
    $region34: #{forward.1} parent=1 // pred_check
      _
    $region35: #{forward.1} parent=1 // pred_check_branch
      %1624 = sbr.rel (0) target = $region37
    $region36: #{forward.1} parent=1 // pred_region
      %s1626 = ssub.s32 64, 64
      %1627 = vsyncadd [#allocation10], %s1626
      %s1628 = sshll.u32 [#allocation9], 4
      %s1629 = int_to_ptr.vmem [resolvable:$true] %s1628
      %1634 = dma.vmem_to_hbm [thread:$0]  %s1629, 64, %s5, [#allocation10], 32, 32, 2
    $region37: #{forward.1} parent=1 // pred_fallthru
      _
    // Predicated region
    $region38: #{forward.1} parent=1 // pred_check
      _
    $region39: #{forward.1} parent=1 // pred_check_branch
      %1636 = sbr.rel (0) target = $region41
    $region40: #{forward.1} parent=1 // pred_region
      %s1638 = ssub.s32 64, 64
      %1639 = vsyncadd [#allocation10], %s1638
      %s1640 = sshll.u32 [#allocation11], 4
      %s1641 = int_to_ptr.vmem [resolvable:$true] %s1640
      %1646 = dma.vmem_to_hbm [thread:$0]  %s1641, 64, %s6, [#allocation10], 32, 32, 2
    $region41: #{forward.1} parent=1 // pred_fallthru
      _
    // Predicated region
    $region42: #{forward.1} parent=1 // pred_check
      _
    $region43: #{forward.1} parent=1 // pred_check_branch
      %1648 = sbr.rel (0) target = $region45
    $region44: #{forward.1} parent=1 // pred_region
      %1649 = dma.done [#allocation4], 256
    $region45: #{forward.1} parent=1 // pred_fallthru
      _
    // Predicated region
    $region46: #{forward.1} parent=1 // pred_check
      _
    $region47: #{forward.1} parent=1 // pred_check_branch
      %1651 = sbr.rel (0) target = $region49
    $region48: #{forward.1} parent=1 // pred_region
      %1652 = dma.done [#allocation10], 64
    $region49: #{forward.1} parent=1 // pred_fallthru
      _
    // Predicated region
    $region50: #{forward.1} parent=1 // pred_check
      _
    $region51: #{forward.1} parent=1 // pred_check_branch
      %1654 = sbr.rel (0) target = $region53
    $region52: #{forward.1} parent=1 // pred_region
      %1655 = dma.done [#allocation10], 64
    $region53: #{forward.1} parent=1 // pred_fallthru
      _
    %1656 = vsyncpa [#allocation3], 1
    %1657 = vsyncpa [#allocation6], 1
    %1658 = vsyncpa [#allocation4], 1
    %1659 = vsyncpa [#allocation10], 1

</llo_original>
